<compile_context>
chip_gen: v5e
topology: v5e:2x2
jax: 0.10.0
libtpu: 0.0.40
codegen_flags: <defaults>
</compile_context>

<pallas_src>
import jax
import jax.numpy as jnp
from jax.experimental import pallas as pl
from jax.experimental.pallas import tpu as pltpu


# ---------------------------------------------------------------------------
# Pass 1: HW2 = relu(A_hat @ XW1' + shift') @ W2
# grid = (row blocks of A, column blocks of A); axis 1 is the reduction axis.
# ---------------------------------------------------------------------------
def _pass1_kernel(a_ref, xw1_ref, shift_ref, w2_ref, hw2_ref, acc_ref):
    k = pl.program_id(1)

    @pl.when(k == 0)
    def _():
        acc_ref[...] = jnp.zeros_like(acc_ref)

    # (TILE, TILE) bf16 @ (TILE, Hp) bf16, f32 accumulation on the MXU.
    acc_ref[...] += jnp.dot(a_ref[...], xw1_ref[...],
                            preferred_element_type=jnp.float32)

    @pl.when(k == pl.num_programs(1) - 1)
    def _():
        # Folded BN/bias shift, ReLU, then fuse the tiny @W2 so the
        # cross-pass intermediate is only (N, O_pad).
        h = jnp.maximum(acc_ref[...] + shift_ref[...], 0.0)
        hw2 = jnp.dot(h, w2_ref[...], preferred_element_type=jnp.float32)
        hw2_ref[...] = hw2.astype(hw2_ref.dtype)


# ---------------------------------------------------------------------------
# Pass 2: OUT = log_softmax(A_hat @ HW2 + b2_masked)
# ---------------------------------------------------------------------------
def _pass2_kernel(a_ref, hw2_ref, b2_ref, out_ref, acc_ref):
    k = pl.program_id(1)

    @pl.when(k == 0)
    def _():
        acc_ref[...] = jnp.zeros_like(acc_ref)

    acc_ref[...] += jnp.dot(a_ref[...], hw2_ref[...],
                            preferred_element_type=jnp.float32)

    @pl.when(k == pl.num_programs(1) - 1)
    def _():
        # b2_ref holds -1e30 in padded class columns -> exp() underflows to 0,
        # so padding never corrupts the lse.
        logits = acc_ref[...] + b2_ref[...]
        m = jnp.max(logits, axis=-1, keepdims=True)
        z = logits - m
        lse = jnp.log(jnp.sum(jnp.exp(z), axis=-1, keepdims=True))
        out_ref[...] = z - lse


def _round_up(x, m):
    return (x + m - 1) // m * m


def fraud_gnn_forward(x, edge_index, params, *, max_tile=512):
    """x: (N, C) float32 node features; edge_index: (2, E) int32 (src, dst)."""
    N, C = x.shape
    w1, b1 = params["w1"], params["b1"]
    gamma, beta = params["bn_gamma"], params["bn_beta"]
    run_mean, run_var = params["bn_mean"], params["bn_var"]
    w2, b2 = params["w2"], params["b2"]
    H = w1.shape[1]
    O = w2.shape[1]

    LANE = 128
    # Tile as large as useful: big tiles amortize per-step overhead (mem-bound
    # A streaming), small graphs collapse to a single block.
    tile = min(max_tile, _round_up(N, LANE))
    Np = _round_up(N, tile)
    Hp = _round_up(H, LANE)
    Op = _round_up(O, LANE)

    # ---- glue: dense GCN-normalized adjacency (self-loops + sym. norm) ----
    src, dst = edge_index[0], edge_index[1]
    a = jnp.zeros((N, N), jnp.float32).at[dst, src].add(1.0)   # message j->i
    a = a + jnp.eye(N, dtype=jnp.float32)                      # add self-loops
    deg = jnp.sum(a, axis=1)
    dinv = jax.lax.rsqrt(deg)
    a_hat = dinv[:, None] * a * dinv[None, :]                  # D^-1/2 Ã D^-1/2
    # bf16 halves HBM traffic / VMEM residency of the dominant operand.
    a_bf16 = jnp.zeros((Np, Np), jnp.bfloat16).at[:N, :N].set(
        a_hat.astype(jnp.bfloat16))

    # ---- glue: fold eval BatchNorm + conv1 bias into W1 / shift ----
    eps = 1e-5
    s = gamma * jax.lax.rsqrt(run_var + eps)
    w1f = w1 * s[None, :]                        # scale folded into columns
    shift = b1 * s + (beta - run_mean * s)       # (H,)

    # XW1' is tiny (N, H): compute in f32 here, stream to the kernel as bf16.
    xw1 = jnp.dot(x, w1f, preferred_element_type=jnp.float32)
    xw1_p = jnp.zeros((Np, Hp), jnp.bfloat16).at[:N, :H].set(
        xw1.astype(jnp.bfloat16))

    shift_p = jnp.zeros((1, Hp), jnp.float32).at[0, :H].set(shift)
    w2_p = jnp.zeros((Hp, Op), jnp.float32).at[:H, :O].set(w2)
    b2_p = jnp.full((1, Op), -1e30, jnp.float32).at[0, :O].set(b2)

    grid = (Np // tile, Np // tile)
    cparams = pltpu.CompilerParams(
        dimension_semantics=("parallel", "arbitrary"),   # rows -> 2 TCs on v7x
        vmem_limit_bytes=32 * 1024 * 1024,               # safe on v5e/v6e/v7x
    )
    a_spec = pl.BlockSpec((tile, tile), lambda i, k: (i, k))

    # ---- pass 1: HW2 = relu(A @ XW1' + shift') @ W2 ----
    hw2 = pl.pallas_call(
        _pass1_kernel,
        out_shape=jax.ShapeDtypeStruct((Np, Op), jnp.bfloat16),
        grid_spec=pltpu.PrefetchScalarGridSpec(
            num_scalar_prefetch=0,
            grid=grid,
            in_specs=[
                a_spec,                                          # A tile
                pl.BlockSpec((tile, Hp), lambda i, k: (k, 0)),   # XW1' tile
                pl.BlockSpec((1, Hp), lambda i, k: (0, 0)),      # folded shift
                pl.BlockSpec((Hp, Op), lambda i, k: (0, 0)),     # W2
            ],
            out_specs=pl.BlockSpec((tile, Op), lambda i, k: (i, 0)),
            scratch_shapes=[pltpu.VMEM((tile, Hp), jnp.float32)],
        ),
        compiler_params=cparams,
        cost_estimate=pl.CostEstimate(
            flops=2 * Np * Np * Hp + 2 * Np * Hp * Op,
            transcendentals=0,
            bytes_accessed=Np * Np * 2 + Np * Hp * 2 + Hp * Op * 4
                           + Hp * 4 + Np * Op * 2,
        ),
    )(a_bf16, xw1_p, shift_p, w2_p)

    # ---- pass 2: OUT = log_softmax(A @ HW2 + b2) ----
    out_p = pl.pallas_call(
        _pass2_kernel,
        out_shape=jax.ShapeDtypeStruct((Np, Op), jnp.float32),
        grid_spec=pltpu.PrefetchScalarGridSpec(
            num_scalar_prefetch=0,
            grid=grid,
            in_specs=[
                a_spec,                                          # A tile
                pl.BlockSpec((tile, Op), lambda i, k: (k, 0)),   # HW2 tile
                pl.BlockSpec((1, Op), lambda i, k: (0, 0)),      # masked b2
            ],
            out_specs=pl.BlockSpec((tile, Op), lambda i, k: (i, 0)),
            scratch_shapes=[pltpu.VMEM((tile, Op), jnp.float32)],
        ),
        compiler_params=cparams,
        cost_estimate=pl.CostEstimate(
            flops=2 * Np * Np * Op,
            transcendentals=Np * Op,
            bytes_accessed=Np * Np * 2 + Np * Op * 2 + Op * 4 + Np * Op * 4,
        ),
    )(a_bf16, hw2, b2_p)

    # slice padded node rows and padded class columns back off
    return out_p[:N, :O]


if __name__ == "__main__":
    key = jax.random.PRNGKey(0)
    # nodes, in_channels, hidden, out_classes, edges (module default hidden=64)
    N, C, HID, OUT, E = 200, 16, 64, 2, 1024
    ks = jax.random.split(key, 7)

    x = jax.random.normal(ks[0], (N, C), dtype=jnp.float32)
    src = jax.random.randint(ks[1], (E,), 0, N)
    dst = jax.random.randint(ks[2], (E,), 0, N)
    edge_index = jnp.stack([src, dst]).astype(jnp.int32)

    # Deterministic parameter init (shapes match GCNConv / BatchNorm1d).
    params = dict(
        w1=jax.random.normal(ks[3], (C, HID), dtype=jnp.float32) * 0.1,
        b1=jax.random.normal(ks[4], (HID,), dtype=jnp.float32) * 0.05,
        bn_gamma=jnp.ones((HID,), jnp.float32),
        bn_beta=jnp.zeros((HID,), jnp.float32),
        bn_mean=jnp.zeros((HID,), jnp.float32),
        bn_var=jnp.ones((HID,), jnp.float32),
        w2=jax.random.normal(ks[5], (HID, OUT), dtype=jnp.float32) * 0.1,
        b2=jax.random.normal(ks[6], (OUT,), dtype=jnp.float32) * 0.05,
    )

    fwd = jax.jit(lambda xx, ei: fraud_gnn_forward(xx, ei, params))
    out = fwd(x, edge_index)
    jax.block_until_ready(out)

    # ---- pure-JAX f32 reference of the same eval-mode forward ----
    a_ref = jnp.zeros((N, N), jnp.float32).at[dst, src].add(1.0) + jnp.eye(N)
    dinv = jax.lax.rsqrt(jnp.sum(a_ref, axis=1))
    a_hat = dinv[:, None] * a_ref * dinv[None, :]
    h1 = a_hat @ (x @ params["w1"]) + params["b1"]
    sref = params["bn_gamma"] * jax.lax.rsqrt(params["bn_var"] + 1e-5)
    h1 = (h1 - params["bn_mean"]) * sref + params["bn_beta"]
    h1 = jnp.maximum(h1, 0.0)
    h2 = a_hat @ (h1 @ params["w2"]) + params["b2"]
    ref = jax.nn.log_softmax(h2, axis=1)

    assert out.shape == (N, OUT)
    row_sums = jnp.exp(out).sum(axis=1)          # log-probs -> rows sum to 1
    assert bool(jnp.all(jnp.abs(row_sums - 1.0) < 1e-4))
    max_err = float(jnp.max(jnp.abs(out - ref)))  # bf16-A tolerance
    assert max_err < 5e-2, max_err

    print("KERNEL_OK")
</pallas_src>

<mosaic_0001>
module attributes {stable_mosaic.version = 11 : i64} {
  func.func @_pass1_kernel(%arg0: i32, %arg1: i32, %arg2: memref<256x256xbf16, #tpu.memory_space<vmem>>, %arg3: memref<256x128xbf16, #tpu.memory_space<vmem>>, %arg4: memref<1x128xf32, #tpu.memory_space<vmem>>, %arg5: memref<128x128xf32, #tpu.memory_space<vmem>>, %arg6: memref<256x128xbf16, #tpu.memory_space<vmem>>, %arg7: memref<256x128xf32, #tpu.memory_space<vmem>>) attributes {dimension_semantics = [#tpu.dimension_semantics<parallel>, #tpu.dimension_semantics<arbitrary>], iteration_bounds = array<i64: 1, 1>, scalar_prefetch = 0 : i64, scratch_operands = 1 : i64, tpu.core_type = #tpu.core_type<tc>, window_params = [{transform_indices = @transform_0, window_bounds = array<i64: 256, 256>}, {transform_indices = @transform_1, window_bounds = array<i64: 256, 128>}, {pipeline_mode = #tpu.pipeline_mode<synchronous>, transform_indices = @transform_2, window_bounds = array<i64: 1, 128>}, {pipeline_mode = #tpu.pipeline_mode<synchronous>, transform_indices = @transform_3, window_bounds = array<i64: 128, 128>}, {transform_indices = @transform_4, window_bounds = array<i64: 256, 128>}]} {
    %c0_i32 = arith.constant 0 : i32
    %0 = arith.cmpi eq, %arg1, %c0_i32 : i32
    %1 = arith.extui %0 : i1 to i32
    %c0_i32_0 = arith.constant 0 : i32
    %2 = arith.cmpi ne, %1, %c0_i32_0 : i32
    scf.if %2 {
      %cst_10 = arith.constant 0.000000e+00 : f32
      %12 = vector.broadcast %cst_10 : f32 to vector<256x128xf32>
      %c0_11 = arith.constant 0 : index
      %c0_12 = arith.constant 0 : index
      %13 = vector.load %arg7[%c0_11, %c0_12] : memref<256x128xf32, #tpu.memory_space<vmem>>, vector<256x128xf32>
      tpu.vector_store %arg7[%c0_11, %c0_12], %12 {strides = array<i32>} : memref<256x128xf32, #tpu.memory_space<vmem>>, vector<256x128xf32>,
    } else {
    }
    %c0 = arith.constant 0 : index
    %c0_1 = arith.constant 0 : index
    %3 = vector.load %arg7[%c0, %c0_1] : memref<256x128xf32, #tpu.memory_space<vmem>>, vector<256x128xf32>
    %c0_2 = arith.constant 0 : index
    %c0_3 = arith.constant 0 : index
    %4 = vector.load %arg2[%c0_2, %c0_3] : memref<256x256xbf16, #tpu.memory_space<vmem>>, vector<256x256xbf16>
    %c0_4 = arith.constant 0 : index
    %c0_5 = arith.constant 0 : index
    %5 = vector.load %arg3[%c0_4, %c0_5] : memref<256x128xbf16, #tpu.memory_space<vmem>>, vector<256x128xbf16>
    %cst = arith.constant dense<0.000000e+00> : vector<256x128xf32>
    %6 = tpu.matmul %4, %5, %cst {dimension_numbers = #tpu.dot_dimension_numbers<[1], [0], [0], [1], [0, 0, 1, 1], [], []>} : vector<256x256xbf16>, vector<256x128xbf16>, vector<256x128xf32> -> vector<256x128xf32>
    %7 = arith.addf %3, %6 : vector<256x128xf32>
    %c0_6 = arith.constant 0 : index
    %c0_7 = arith.constant 0 : index
    %8 = vector.load %arg7[%c0_6, %c0_7] : memref<256x128xf32, #tpu.memory_space<vmem>>, vector<256x128xf32>
    tpu.vector_store %arg7[%c0_6, %c0_7], %7 {strides = array<i32>} : memref<256x128xf32, #tpu.memory_space<vmem>>, vector<256x128xf32>,
    %c0_i32_8 = arith.constant 0 : i32
    %9 = arith.cmpi eq, %arg1, %c0_i32_8 : i32
    %10 = arith.extui %9 : i1 to i32
    %c0_i32_9 = arith.constant 0 : i32
    %11 = arith.cmpi ne, %10, %c0_i32_9 : i32
    scf.if %11 {
      %c0_10 = arith.constant 0 : index
      %c0_11 = arith.constant 0 : index
      %12 = vector.load %arg7[%c0_10, %c0_11] : memref<256x128xf32, #tpu.memory_space<vmem>>, vector<256x128xf32>
      %c0_12 = arith.constant 0 : index
      %c0_13 = arith.constant 0 : index
      %13 = vector.load %arg4[%c0_12, %c0_13] : memref<1x128xf32, #tpu.memory_space<vmem>>, vector<1x128xf32>
      %14 = vector.broadcast %13 : vector<1x128xf32> to vector<256x128xf32>
      %15 = arith.addf %12, %14 : vector<256x128xf32>
      %cst_14 = arith.constant 0.000000e+00 : f32
      %16 = vector.broadcast %cst_14 : f32 to vector<256x128xf32>
      %17 = arith.maximumf %15, %16 : vector<256x128xf32>
      %c0_15 = arith.constant 0 : index
      %c0_16 = arith.constant 0 : index
      %18 = vector.load %arg5[%c0_15, %c0_16] : memref<128x128xf32, #tpu.memory_space<vmem>>, vector<128x128xf32>
      %cst_17 = arith.constant dense<0.000000e+00> : vector<256x128xf32>
      %19 = tpu.matmul %17, %18, %cst_17 {dimension_numbers = #tpu.dot_dimension_numbers<[1], [0], [0], [1], [0, 0, 1, 1], [], []>} : vector<256x128xf32>, vector<128x128xf32>, vector<256x128xf32> -> vector<256x128xf32>
      %20 = arith.truncf %19 : vector<256x128xf32> to vector<256x128xbf16>
      %c0_18 = arith.constant 0 : index
      %c0_19 = arith.constant 0 : index
      %21 = vector.load %arg6[%c0_18, %c0_19] : memref<256x128xbf16, #tpu.memory_space<vmem>>, vector<256x128xbf16>
      tpu.vector_store %arg6[%c0_18, %c0_19], %20 {strides = array<i32>} : memref<256x128xbf16, #tpu.memory_space<vmem>>, vector<256x128xbf16>,
    } else {
    }
    return
  }
  func.func @transform_0(%arg0: i32, %arg1: i32) -> (i32, i32) {
    %c0_i32 = arith.constant 0 : i32
    return %arg0, %arg1 : i32, i32
  }
  func.func @transform_1(%arg0: i32, %arg1: i32) -> (i32, i32) {
    %c0_i32 = arith.constant 0 : i32
    %c0_i32_0 = arith.constant 0 : i32
    return %arg1, %c0_i32 : i32, i32
  }
  func.func @transform_2(%arg0: i32, %arg1: i32) -> (i32, i32) {
    %c0_i32 = arith.constant 0 : i32
    %c0_i32_0 = arith.constant 0 : i32
    %c0_i32_1 = arith.constant 0 : i32
    return %c0_i32, %c0_i32_0 : i32, i32
  }
  func.func @transform_3(%arg0: i32, %arg1: i32) -> (i32, i32) {
    %c0_i32 = arith.constant 0 : i32
    %c0_i32_0 = arith.constant 0 : i32
    %c0_i32_1 = arith.constant 0 : i32
    return %c0_i32, %c0_i32_0 : i32, i32
  }
  func.func @transform_4(%arg0: i32, %arg1: i32) -> (i32, i32) {
    %c0_i32 = arith.constant 0 : i32
    %c0_i32_0 = arith.constant 0 : i32
    return %arg0, %c0_i32 : i32, i32
  }
}

module attributes {stable_mosaic.version = 11 : i64} {
  func.func @_pass2_kernel(%arg0: i32, %arg1: i32, %arg2: memref<256x256xbf16, #tpu.memory_space<vmem>>, %arg3: memref<256x128xbf16, #tpu.memory_space<vmem>>, %arg4: memref<1x128xf32, #tpu.memory_space<vmem>>, %arg5: memref<256x128xf32, #tpu.memory_space<vmem>>, %arg6: memref<256x128xf32, #tpu.memory_space<vmem>>) attributes {dimension_semantics = [#tpu.dimension_semantics<parallel>, #tpu.dimension_semantics<arbitrary>], iteration_bounds = array<i64: 1, 1>, scalar_prefetch = 0 : i64, scratch_operands = 1 : i64, tpu.core_type = #tpu.core_type<tc>, window_params = [{transform_indices = @transform_0, window_bounds = array<i64: 256, 256>}, {transform_indices = @transform_1, window_bounds = array<i64: 256, 128>}, {pipeline_mode = #tpu.pipeline_mode<synchronous>, transform_indices = @transform_2, window_bounds = array<i64: 1, 128>}, {transform_indices = @transform_3, window_bounds = array<i64: 256, 128>}]} {
    %c0_i32 = arith.constant 0 : i32
    %0 = arith.cmpi eq, %arg1, %c0_i32 : i32
    %1 = arith.extui %0 : i1 to i32
    %c0_i32_0 = arith.constant 0 : i32
    %2 = arith.cmpi ne, %1, %c0_i32_0 : i32
    scf.if %2 {
      %cst_10 = arith.constant 0.000000e+00 : f32
      %12 = vector.broadcast %cst_10 : f32 to vector<256x128xf32>
      %c0_11 = arith.constant 0 : index
      %c0_12 = arith.constant 0 : index
      %13 = vector.load %arg6[%c0_11, %c0_12] : memref<256x128xf32, #tpu.memory_space<vmem>>, vector<256x128xf32>
      tpu.vector_store %arg6[%c0_11, %c0_12], %12 {strides = array<i32>} : memref<256x128xf32, #tpu.memory_space<vmem>>, vector<256x128xf32>,
    } else {
    }
    %c0 = arith.constant 0 : index
    %c0_1 = arith.constant 0 : index
    %3 = vector.load %arg6[%c0, %c0_1] : memref<256x128xf32, #tpu.memory_space<vmem>>, vector<256x128xf32>
    %c0_2 = arith.constant 0 : index
    %c0_3 = arith.constant 0 : index
    %4 = vector.load %arg2[%c0_2, %c0_3] : memref<256x256xbf16, #tpu.memory_space<vmem>>, vector<256x256xbf16>
    %c0_4 = arith.constant 0 : index
    %c0_5 = arith.constant 0 : index
    %5 = vector.load %arg3[%c0_4, %c0_5] : memref<256x128xbf16, #tpu.memory_space<vmem>>, vector<256x128xbf16>
    %cst = arith.constant dense<0.000000e+00> : vector<256x128xf32>
    %6 = tpu.matmul %4, %5, %cst {dimension_numbers = #tpu.dot_dimension_numbers<[1], [0], [0], [1], [0, 0, 1, 1], [], []>} : vector<256x256xbf16>, vector<256x128xbf16>, vector<256x128xf32> -> vector<256x128xf32>
    %7 = arith.addf %3, %6 : vector<256x128xf32>
    %c0_6 = arith.constant 0 : index
    %c0_7 = arith.constant 0 : index
    %8 = vector.load %arg6[%c0_6, %c0_7] : memref<256x128xf32, #tpu.memory_space<vmem>>, vector<256x128xf32>
    tpu.vector_store %arg6[%c0_6, %c0_7], %7 {strides = array<i32>} : memref<256x128xf32, #tpu.memory_space<vmem>>, vector<256x128xf32>,
    %c0_i32_8 = arith.constant 0 : i32
    %9 = arith.cmpi eq, %arg1, %c0_i32_8 : i32
    %10 = arith.extui %9 : i1 to i32
    %c0_i32_9 = arith.constant 0 : i32
    %11 = arith.cmpi ne, %10, %c0_i32_9 : i32
    scf.if %11 {
      %c0_10 = arith.constant 0 : index
      %c0_11 = arith.constant 0 : index
      %12 = vector.load %arg6[%c0_10, %c0_11] : memref<256x128xf32, #tpu.memory_space<vmem>>, vector<256x128xf32>
      %c0_12 = arith.constant 0 : index
      %c0_13 = arith.constant 0 : index
      %13 = vector.load %arg4[%c0_12, %c0_13] : memref<1x128xf32, #tpu.memory_space<vmem>>, vector<1x128xf32>
      %14 = vector.broadcast %13 : vector<1x128xf32> to vector<256x128xf32>
      %15 = arith.addf %12, %14 : vector<256x128xf32>
      %cst_14 = arith.constant dense<0xFF800000> : vector<256xf32>
      %16 = vector.multi_reduction <maximumf>, %15, %cst_14 [1] : vector<256x128xf32> to vector<256xf32>
      %17 = vector.shape_cast %16 : vector<256xf32> to vector<256x1xf32>
      %18 = vector.broadcast %17 : vector<256x1xf32> to vector<256x128xf32>
      %19 = arith.subf %15, %18 : vector<256x128xf32>
      %20 = math.exp %19 : vector<256x128xf32>
      %cst_15 = arith.constant dense<0.000000e+00> : vector<256xf32>
      %21 = vector.multi_reduction <add>, %20, %cst_15 [1] : vector<256x128xf32> to vector<256xf32>
      %22 = vector.shape_cast %21 : vector<256xf32> to vector<256x1xf32>
      %23 = math.log %22 : vector<256x1xf32>
      %24 = vector.broadcast %23 : vector<256x1xf32> to vector<256x128xf32>
      %25 = arith.subf %19, %24 : vector<256x128xf32>
      %c0_16 = arith.constant 0 : index
      %c0_17 = arith.constant 0 : index
      %26 = vector.load %arg5[%c0_16, %c0_17] : memref<256x128xf32, #tpu.memory_space<vmem>>, vector<256x128xf32>
      tpu.vector_store %arg5[%c0_16, %c0_17], %25 {strides = array<i32>} : memref<256x128xf32, #tpu.memory_space<vmem>>, vector<256x128xf32>,
    } else {
    }
    return
  }
  func.func @transform_0(%arg0: i32, %arg1: i32) -> (i32, i32) {
    %c0_i32 = arith.constant 0 : i32
    return %arg0, %arg1 : i32, i32
  }
  func.func @transform_1(%arg0: i32, %arg1: i32) -> (i32, i32) {
    %c0_i32 = arith.constant 0 : i32
    %c0_i32_0 = arith.constant 0 : i32
    return %arg1, %c0_i32 : i32, i32
  }
  func.func @transform_2(%arg0: i32, %arg1: i32) -> (i32, i32) {
    %c0_i32 = arith.constant 0 : i32
    %c0_i32_0 = arith.constant 0 : i32
    %c0_i32_1 = arith.constant 0 : i32
    return %c0_i32, %c0_i32_0 : i32, i32
  }
  func.func @transform_3(%arg0: i32, %arg1: i32) -> (i32, i32) {
    %c0_i32 = arith.constant 0 : i32
    %c0_i32_0 = arith.constant 0 : i32
    return %arg0, %c0_i32 : i32, i32
  }
}

</mosaic_0001>

<llo_original>
// kernel: _lambda_.2
$region0: #{_lambda_.2}
  #allocation0 [shape = 'u32[]', space=smem, size = 0x4, offset = 0x4, fixed_abs, tag = 'smem constant byte address 0x4 - core index']
  #allocation1 [shape = 'u32[72,128]{1,0:T(1,128)}', space=vmem, size = 0x9000, scoped, tag = 'internal scratch']
  #allocation2 [shape = 'f32[256,128]{1,0:T(8,128)}', space=vmem, size = 0x20000, scoped, tag = 'scratch operand']
  %s0 = inlined_call_operand.vmem [shape: bf16[256,256], index: 0, kind: input, shape index: {}]
  %s1 = inlined_call_operand.vmem [shape: bf16[256,128], index: 1, kind: input, shape index: {}]
  %s2 = inlined_call_operand.vmem [shape: f32[1,128], index: 2, kind: input, shape index: {}]
  %s3 = inlined_call_operand.vmem [shape: f32[128,128], index: 3, kind: input, shape index: {}]
  %s4 = inlined_call_operand.vmem [shape: bf16[256,128], index: 4, kind: output, shape index: {}]
  %s5 = sld [smem:[#allocation0]]
  $region34: #{_lambda_.2} parent=0
    _
  %s7 = ssub.s32 1, %s5
  %s8 = scalar_select 0, %s7, %s5
  // Predicated region
  $region2: #{_lambda_.2} parent=0 // pred_check
    _
  $region3: #{_lambda_.2} parent=0 // pred_check_branch
    %10 = sbr.rel (0) target = $region5
  $region4: #{_lambda_.2} parent=0 // pred_region
    _
  $region5: #{_lambda_.2} parent=0 // pred_fallthru
    _
  // Predicated region
  $region6: #{_lambda_.2} parent=0 // pred_check
    _
  $region7: #{_lambda_.2} parent=0 // pred_check_branch
    %12 = sbr.rel (0) target = $region9
  $region8: #{_lambda_.2} parent=0 // pred_region
    _
  $region9: #{_lambda_.2} parent=0 // pred_fallthru
    _
  // Predicated region
  $region10: #{_lambda_.2} parent=0 // pred_check
    _
  $region11: #{_lambda_.2} parent=0 // pred_check_branch
    %14 = sbr.rel (0) target = $region13
  $region12: #{_lambda_.2} parent=0 // pred_region
    _
  $region13: #{_lambda_.2} parent=0 // pred_fallthru
    _
  // Predicated region
  $region14: #{_lambda_.2} parent=0 // pred_check
    _
  $region15: #{_lambda_.2} parent=0 // pred_check_branch
    %16 = sbr.rel (0) target = $region17
  $region16: #{_lambda_.2} parent=0 // pred_region
    _
  $region17: #{_lambda_.2} parent=0 // pred_fallthru
    _
  %p17 = scmp.eq.s32.totalorder 0, 0
  // Predicated region
  $region18: #{_lambda_.2} parent=0 // pred_check
    %p18 = pneg %p17
  $region19: #{_lambda_.2} parent=0 // pred_check_branch
    %20 = sbr.rel (%p18) target = $region21
  $region20: #{_lambda_.2} parent=0 // pred_region
    %21 = vst [vmem:[#allocation2] sm:$0xff] 0.0
    %22 = vst [vmem:[#allocation2 + $0x8] sm:$0xff] 0.0
    %23 = vst [vmem:[#allocation2 + $0x10] sm:$0xff] 0.0
    %24 = vst [vmem:[#allocation2 + $0x18] sm:$0xff] 0.0
    %25 = vst [vmem:[#allocation2 + $0x20] sm:$0xff] 0.0
    %26 = vst [vmem:[#allocation2 + $0x28] sm:$0xff] 0.0
    %27 = vst [vmem:[#allocation2 + $0x30] sm:$0xff] 0.0
    %28 = vst [vmem:[#allocation2 + $0x38] sm:$0xff] 0.0
    %29 = vst [vmem:[#allocation2 + $0x40] sm:$0xff] 0.0
    %30 = vst [vmem:[#allocation2 + $0x48] sm:$0xff] 0.0
    %31 = vst [vmem:[#allocation2 + $0x50] sm:$0xff] 0.0
    %32 = vst [vmem:[#allocation2 + $0x58] sm:$0xff] 0.0
    %33 = vst [vmem:[#allocation2 + $0x60] sm:$0xff] 0.0
    %34 = vst [vmem:[#allocation2 + $0x68] sm:$0xff] 0.0
    %35 = vst [vmem:[#allocation2 + $0x70] sm:$0xff] 0.0
    %36 = vst [vmem:[#allocation2 + $0x78] sm:$0xff] 0.0
    %37 = vst [vmem:[#allocation2 + $0x80] sm:$0xff] 0.0
    %38 = vst [vmem:[#allocation2 + $0x88] sm:$0xff] 0.0
    %39 = vst [vmem:[#allocation2 + $0x90] sm:$0xff] 0.0
    %40 = vst [vmem:[#allocation2 + $0x98] sm:$0xff] 0.0
    %41 = vst [vmem:[#allocation2 + $0xa0] sm:$0xff] 0.0
    %42 = vst [vmem:[#allocation2 + $0xa8] sm:$0xff] 0.0
    %43 = vst [vmem:[#allocation2 + $0xb0] sm:$0xff] 0.0
    %44 = vst [vmem:[#allocation2 + $0xb8] sm:$0xff] 0.0
    %45 = vst [vmem:[#allocation2 + $0xc0] sm:$0xff] 0.0
    %46 = vst [vmem:[#allocation2 + $0xc8] sm:$0xff] 0.0
    %47 = vst [vmem:[#allocation2 + $0xd0] sm:$0xff] 0.0
    %48 = vst [vmem:[#allocation2 + $0xd8] sm:$0xff] 0.0
    %49 = vst [vmem:[#allocation2 + $0xe0] sm:$0xff] 0.0
    %50 = vst [vmem:[#allocation2 + $0xe8] sm:$0xff] 0.0
    %51 = vst [vmem:[#allocation2 + $0xf0] sm:$0xff] 0.0
    %52 = vst [vmem:[#allocation2 + $0xf8] sm:$0xff] 0.0
  $region21: #{_lambda_.2} parent=0 // pred_fallthru
    _
  %v53 = vld [vmem:[#allocation2] sm:$0xff]
  %v54 = vld [vmem:[#allocation2 + $0x8] sm:$0xff]
  %v55 = vld [vmem:[#allocation2 + $0x10] sm:$0xff]
  %v56 = vld [vmem:[#allocation2 + $0x18] sm:$0xff]
  %v57 = vld [vmem:[#allocation2 + $0x20] sm:$0xff]
  %v58 = vld [vmem:[#allocation2 + $0x28] sm:$0xff]
  %v59 = vld [vmem:[#allocation2 + $0x30] sm:$0xff]
  %v60 = vld [vmem:[#allocation2 + $0x38] sm:$0xff]
  %v61 = vld [vmem:[#allocation2 + $0x40] sm:$0xff]
  %v62 = vld [vmem:[#allocation2 + $0x48] sm:$0xff]
  %v63 = vld [vmem:[#allocation2 + $0x50] sm:$0xff]
  %v64 = vld [vmem:[#allocation2 + $0x58] sm:$0xff]
  %v65 = vld [vmem:[#allocation2 + $0x60] sm:$0xff]
  %v66 = vld [vmem:[#allocation2 + $0x68] sm:$0xff]
  %v67 = vld [vmem:[#allocation2 + $0x70] sm:$0xff]
  %v68 = vld [vmem:[#allocation2 + $0x78] sm:$0xff]
  %v69 = vld [vmem:[#allocation2 + $0x80] sm:$0xff]
  %v70 = vld [vmem:[#allocation2 + $0x88] sm:$0xff]
  %v71 = vld [vmem:[#allocation2 + $0x90] sm:$0xff]
  %v72 = vld [vmem:[#allocation2 + $0x98] sm:$0xff]
  %v73 = vld [vmem:[#allocation2 + $0xa0] sm:$0xff]
  %v74 = vld [vmem:[#allocation2 + $0xa8] sm:$0xff]
  %v75 = vld [vmem:[#allocation2 + $0xb0] sm:$0xff]
  %v76 = vld [vmem:[#allocation2 + $0xb8] sm:$0xff]
  %v77 = vld [vmem:[#allocation2 + $0xc0] sm:$0xff]
  %v78 = vld [vmem:[#allocation2 + $0xc8] sm:$0xff]
  %v79 = vld [vmem:[#allocation2 + $0xd0] sm:$0xff]
  %v80 = vld [vmem:[#allocation2 + $0xd8] sm:$0xff]
  %v81 = vld [vmem:[#allocation2 + $0xe0] sm:$0xff]
  %v82 = vld [vmem:[#allocation2 + $0xe8] sm:$0xff]
  %v83 = vld [vmem:[#allocation2 + $0xf0] sm:$0xff]
  %v84 = vld [vmem:[#allocation2 + $0xf8] sm:$0xff]
  %v85 = vld [vmem:[%s0] sm:$0xff]
  %v86 = vld [vmem:[%s0 + $0x8] sm:$0xff]
  %v87 = vld [vmem:[%s0 + $0x10] sm:$0xff]
  %v88 = vld [vmem:[%s0 + $0x18] sm:$0xff]
  %v89 = vld [vmem:[%s0 + $0x20] sm:$0xff]
  %v90 = vld [vmem:[%s0 + $0x28] sm:$0xff]
  %v91 = vld [vmem:[%s0 + $0x30] sm:$0xff]
  %v92 = vld [vmem:[%s0 + $0x38] sm:$0xff]
  %v93 = vld [vmem:[%s0 + $0x40] sm:$0xff]
  %v94 = vld [vmem:[%s0 + $0x48] sm:$0xff]
  %v95 = vld [vmem:[%s0 + $0x50] sm:$0xff]
  %v96 = vld [vmem:[%s0 + $0x58] sm:$0xff]
  %v97 = vld [vmem:[%s0 + $0x60] sm:$0xff]
  %v98 = vld [vmem:[%s0 + $0x68] sm:$0xff]
  %v99 = vld [vmem:[%s0 + $0x70] sm:$0xff]
  %v100 = vld [vmem:[%s0 + $0x78] sm:$0xff]
  %v101 = vld [vmem:[%s0 + $0x80] sm:$0xff]
  %v102 = vld [vmem:[%s0 + $0x88] sm:$0xff]
  %v103 = vld [vmem:[%s0 + $0x90] sm:$0xff]
  %v104 = vld [vmem:[%s0 + $0x98] sm:$0xff]
  %v105 = vld [vmem:[%s0 + $0xa0] sm:$0xff]
  %v106 = vld [vmem:[%s0 + $0xa8] sm:$0xff]
  %v107 = vld [vmem:[%s0 + $0xb0] sm:$0xff]
  %v108 = vld [vmem:[%s0 + $0xb8] sm:$0xff]
  %v109 = vld [vmem:[%s0 + $0xc0] sm:$0xff]
  %v110 = vld [vmem:[%s0 + $0xc8] sm:$0xff]
  %v111 = vld [vmem:[%s0 + $0xd0] sm:$0xff]
  %v112 = vld [vmem:[%s0 + $0xd8] sm:$0xff]
  %v113 = vld [vmem:[%s0 + $0xe0] sm:$0xff]
  %v114 = vld [vmem:[%s0 + $0xe8] sm:$0xff]
  %v115 = vld [vmem:[%s0 + $0xf0] sm:$0xff]
  %v116 = vld [vmem:[%s0 + $0xf8] sm:$0xff]
  %v117 = vld [vmem:[%s1] sm:$0xf]
  %v118 = vld [vmem:[%s1 + $0x4] sm:$0xf]
  %v119 = vld [vmem:[%s1 + $0x8] sm:$0xf]
  %v120 = vld [vmem:[%s1 + $0xc] sm:$0xf]
  %v121 = vld [vmem:[%s1 + $0x10] sm:$0xf]
  %v122 = vld [vmem:[%s1 + $0x14] sm:$0xf]
  %v123 = vld [vmem:[%s1 + $0x18] sm:$0xf]
  %v124 = vld [vmem:[%s1 + $0x1c] sm:$0xf]
  %v125 = vld [vmem:[%s1 + $0x20] sm:$0xf]
  %v126 = vld [vmem:[%s1 + $0x24] sm:$0xf]
  %v127 = vld [vmem:[%s1 + $0x28] sm:$0xf]
  %v128 = vld [vmem:[%s1 + $0x2c] sm:$0xf]
  %v129 = vld [vmem:[%s1 + $0x30] sm:$0xf]
  %v130 = vld [vmem:[%s1 + $0x34] sm:$0xf]
  %v131 = vld [vmem:[%s1 + $0x38] sm:$0xf]
  %v132 = vld [vmem:[%s1 + $0x3c] sm:$0xf]
  %v133 = vld [vmem:[%s1 + $0x40] sm:$0xf]
  %v134 = vld [vmem:[%s1 + $0x44] sm:$0xf]
  %v135 = vld [vmem:[%s1 + $0x48] sm:$0xf]
  %v136 = vld [vmem:[%s1 + $0x4c] sm:$0xf]
  %v137 = vld [vmem:[%s1 + $0x50] sm:$0xf]
  %v138 = vld [vmem:[%s1 + $0x54] sm:$0xf]
  %v139 = vld [vmem:[%s1 + $0x58] sm:$0xf]
  %v140 = vld [vmem:[%s1 + $0x5c] sm:$0xf]
  %v141 = vld [vmem:[%s1 + $0x60] sm:$0xf]
  %v142 = vld [vmem:[%s1 + $0x64] sm:$0xf]
  %v143 = vld [vmem:[%s1 + $0x68] sm:$0xf]
  %v144 = vld [vmem:[%s1 + $0x6c] sm:$0xf]
  %v145 = vld [vmem:[%s1 + $0x70] sm:$0xf]
  %v146 = vld [vmem:[%s1 + $0x74] sm:$0xf]
  %v147 = vld [vmem:[%s1 + $0x78] sm:$0xf]
  %v148 = vld [vmem:[%s1 + $0x7c] sm:$0xf]
  %v181 = vunpack.c.l.b16 %v85
  %v182 = vunpack.c.h.b16 %v85
  %v183 = vunpack.c.l.b16 %v86
  %v184 = vunpack.c.h.b16 %v86
  %v185 = vunpack.c.l.b16 %v87
  %v186 = vunpack.c.h.b16 %v87
  %v187 = vunpack.c.l.b16 %v88
  %v188 = vunpack.c.h.b16 %v88
  %v189 = vunpack.c.l.b16 %v89
  %v190 = vunpack.c.h.b16 %v89
  %v191 = vunpack.c.l.b16 %v90
  %v192 = vunpack.c.h.b16 %v90
  %v193 = vunpack.c.l.b16 %v91
  %v194 = vunpack.c.h.b16 %v91
  %v195 = vunpack.c.l.b16 %v92
  %v196 = vunpack.c.h.b16 %v92
  %v197 = vunpack.c.l.b16 %v93
  %v198 = vunpack.c.h.b16 %v93
  %v199 = vunpack.c.l.b16 %v94
  %v200 = vunpack.c.h.b16 %v94
  %v201 = vunpack.c.l.b16 %v95
  %v202 = vunpack.c.h.b16 %v95
  %v203 = vunpack.c.l.b16 %v96
  %v204 = vunpack.c.h.b16 %v96
  %v205 = vunpack.c.l.b16 %v97
  %v206 = vunpack.c.h.b16 %v97
  %v207 = vunpack.c.l.b16 %v98
  %v208 = vunpack.c.h.b16 %v98
  %v209 = vunpack.c.l.b16 %v99
  %v210 = vunpack.c.h.b16 %v99
  %v211 = vunpack.c.l.b16 %v100
  %v212 = vunpack.c.h.b16 %v100
  %v213 = vunpack.c.l.b16 %v101
  %v214 = vunpack.c.h.b16 %v101
  %v215 = vunpack.c.l.b16 %v102
  %v216 = vunpack.c.h.b16 %v102
  %v217 = vunpack.c.l.b16 %v103
  %v218 = vunpack.c.h.b16 %v103
  %v219 = vunpack.c.l.b16 %v104
  %v220 = vunpack.c.h.b16 %v104
  %v221 = vunpack.c.l.b16 %v105
  %v222 = vunpack.c.h.b16 %v105
  %v223 = vunpack.c.l.b16 %v106
  %v224 = vunpack.c.h.b16 %v106
  %v225 = vunpack.c.l.b16 %v107
  %v226 = vunpack.c.h.b16 %v107
  %v227 = vunpack.c.l.b16 %v108
  %v228 = vunpack.c.h.b16 %v108
  %v229 = vunpack.c.l.b16 %v109
  %v230 = vunpack.c.h.b16 %v109
  %v231 = vunpack.c.l.b16 %v110
  %v232 = vunpack.c.h.b16 %v110
  %v233 = vunpack.c.l.b16 %v111
  %v234 = vunpack.c.h.b16 %v111
  %v235 = vunpack.c.l.b16 %v112
  %v236 = vunpack.c.h.b16 %v112
  %v237 = vunpack.c.l.b16 %v113
  %v238 = vunpack.c.h.b16 %v113
  %v239 = vunpack.c.l.b16 %v114
  %v240 = vunpack.c.h.b16 %v114
  %v241 = vunpack.c.l.b16 %v115
  %v242 = vunpack.c.h.b16 %v115
  %v243 = vunpack.c.l.b16 %v116
  %v244 = vunpack.c.h.b16 %v116
  %v245 = vpack.c.b16 %v183, %v181
  %v246 = vpack.c.b16 %v184, %v182
  %v247 = vpack.c.b16 %v187, %v185
  %v248 = vpack.c.b16 %v188, %v186
  %v249 = vpack.c.b16 %v191, %v189
  %v250 = vpack.c.b16 %v192, %v190
  %v251 = vpack.c.b16 %v195, %v193
  %v252 = vpack.c.b16 %v196, %v194
  %v253 = vpack.c.b16 %v199, %v197
  %v254 = vpack.c.b16 %v200, %v198
  %v255 = vpack.c.b16 %v203, %v201
  %v256 = vpack.c.b16 %v204, %v202
  %v257 = vpack.c.b16 %v207, %v205
  %v258 = vpack.c.b16 %v208, %v206
  %v259 = vpack.c.b16 %v211, %v209
  %v260 = vpack.c.b16 %v212, %v210
  %v261 = vpack.c.b16 %v215, %v213
  %v262 = vpack.c.b16 %v216, %v214
  %v263 = vpack.c.b16 %v219, %v217
  %v264 = vpack.c.b16 %v220, %v218
  %v265 = vpack.c.b16 %v223, %v221
  %v266 = vpack.c.b16 %v224, %v222
  %v267 = vpack.c.b16 %v227, %v225
  %v268 = vpack.c.b16 %v228, %v226
  %v269 = vpack.c.b16 %v231, %v229
  %v270 = vpack.c.b16 %v232, %v230
  %v271 = vpack.c.b16 %v235, %v233
  %v272 = vpack.c.b16 %v236, %v234
  %v273 = vpack.c.b16 %v239, %v237
  %v274 = vpack.c.b16 %v240, %v238
  %v275 = vpack.c.b16 %v243, %v241
  %v276 = vpack.c.b16 %v244, %v242
  %v341 = vunpack.c.l.b16 %v117
  %v342 = vunpack.c.l.b16 %v118
  %v343 = vunpack.c.l.b16 %v119
  %v344 = vunpack.c.l.b16 %v120
  %v345 = vunpack.c.l.b16 %v121
  %v346 = vunpack.c.l.b16 %v122
  %v347 = vunpack.c.l.b16 %v123
  %v348 = vunpack.c.l.b16 %v124
  %v349 = vunpack.c.l.b16 %v125
  %v350 = vunpack.c.l.b16 %v126
  %v351 = vunpack.c.l.b16 %v127
  %v352 = vunpack.c.l.b16 %v128
  %v353 = vunpack.c.l.b16 %v129
  %v354 = vunpack.c.l.b16 %v130
  %v355 = vunpack.c.l.b16 %v131
  %v356 = vunpack.c.l.b16 %v132
  %v357 = vunpack.c.l.b16 %v133
  %v358 = vunpack.c.l.b16 %v134
  %v359 = vunpack.c.l.b16 %v135
  %v360 = vunpack.c.l.b16 %v136
  %v361 = vunpack.c.l.b16 %v137
  %v362 = vunpack.c.l.b16 %v138
  %v363 = vunpack.c.l.b16 %v139
  %v364 = vunpack.c.l.b16 %v140
  %v365 = vunpack.c.l.b16 %v141
  %v366 = vunpack.c.l.b16 %v142
  %v367 = vunpack.c.l.b16 %v143
  %v368 = vunpack.c.l.b16 %v144
  %v369 = vunpack.c.l.b16 %v145
  %v370 = vunpack.c.l.b16 %v146
  %v371 = vunpack.c.l.b16 %v147
  %v372 = vunpack.c.l.b16 %v148
  %v373 = vpack.c.b16 %v342, %v341
  %v374 = vpack.c.b16 %v344, %v343
  %v375 = vpack.c.b16 %v346, %v345
  %v376 = vpack.c.b16 %v348, %v347
  %v377 = vpack.c.b16 %v350, %v349
  %v378 = vpack.c.b16 %v352, %v351
  %v379 = vpack.c.b16 %v354, %v353
  %v380 = vpack.c.b16 %v356, %v355
  %v381 = vpack.c.b16 %v358, %v357
  %v382 = vpack.c.b16 %v360, %v359
  %v383 = vpack.c.b16 %v362, %v361
  %v384 = vpack.c.b16 %v364, %v363
  %v385 = vpack.c.b16 %v366, %v365
  %v386 = vpack.c.b16 %v368, %v367
  %v387 = vpack.c.b16 %v370, %v369
  %v388 = vpack.c.b16 %v372, %v371
  %405 = vmatpush.bf16.msra.mxu0 %v380
  %406 = vmatpush.bf16.msra.mxu0 %v379
  %407 = vmatpush.bf16.msra.mxu0 %v378
  %408 = vmatpush.bf16.msra.mxu0 %v377
  %409 = vmatpush.bf16.msra.mxu0 %v376
  %410 = vmatpush.bf16.msra.mxu0 %v375
  %411 = vmatpush.bf16.msra.mxu0 %v374
  %412 = vmatpush.bf16.msra.mxu0 %v373
  %413 = vmatmul.bf16.gmra.mxu0 %v245
  %v414 = vpop.f32.mrf.mxu0
  %v415 = vadd.f32 0.0, %v414
  %v416 = vpop.f32.mrf.mxu0
  %v417 = vadd.f32 0.0, %v416
  %418 = vmatmul.bf16.gmra.mxu0 %v247
  %v419 = vpop.f32.mrf.mxu0
  %v420 = vadd.f32 0.0, %v419
  %v421 = vpop.f32.mrf.mxu0
  %v422 = vadd.f32 0.0, %v421
  %423 = vmatmul.bf16.gmra.mxu0 %v249
  %v424 = vpop.f32.mrf.mxu0
  %v425 = vadd.f32 0.0, %v424
  %v426 = vpop.f32.mrf.mxu0
  %v427 = vadd.f32 0.0, %v426
  %428 = vmatmul.bf16.gmra.mxu0 %v251
  %v429 = vpop.f32.mrf.mxu0
  %v430 = vadd.f32 0.0, %v429
  %v431 = vpop.f32.mrf.mxu0
  %v432 = vadd.f32 0.0, %v431
  %433 = vmatmul.bf16.gmra.mxu0 %v253
  %v434 = vpop.f32.mrf.mxu0
  %v435 = vadd.f32 0.0, %v434
  %v436 = vpop.f32.mrf.mxu0
  %v437 = vadd.f32 0.0, %v436
  %438 = vmatmul.bf16.gmra.mxu0 %v255
  %v439 = vpop.f32.mrf.mxu0
  %v440 = vadd.f32 0.0, %v439
  %v441 = vpop.f32.mrf.mxu0
  %v442 = vadd.f32 0.0, %v441
  %443 = vmatmul.bf16.gmra.mxu0 %v257
  %v444 = vpop.f32.mrf.mxu0
  %v445 = vadd.f32 0.0, %v444
  %v446 = vpop.f32.mrf.mxu0
  %v447 = vadd.f32 0.0, %v446
  %448 = vmatmul.bf16.gmra.mxu0 %v259
  %v449 = vpop.f32.mrf.mxu0
  %v450 = vadd.f32 0.0, %v449
  %v451 = vpop.f32.mrf.mxu0
  %v452 = vadd.f32 0.0, %v451
  %453 = vmatmul.bf16.gmra.mxu0 %v261
  %v454 = vpop.f32.mrf.mxu0
  %v455 = vadd.f32 0.0, %v454
  %v456 = vpop.f32.mrf.mxu0
  %v457 = vadd.f32 0.0, %v456
  %458 = vmatmul.bf16.gmra.mxu0 %v263
  %v459 = vpop.f32.mrf.mxu0
  %v460 = vadd.f32 0.0, %v459
  %v461 = vpop.f32.mrf.mxu0
  %v462 = vadd.f32 0.0, %v461
  %463 = vmatmul.bf16.gmra.mxu0 %v265
  %v464 = vpop.f32.mrf.mxu0
  %v465 = vadd.f32 0.0, %v464
  %v466 = vpop.f32.mrf.mxu0
  %v467 = vadd.f32 0.0, %v466
  %468 = vmatmul.bf16.gmra.mxu0 %v267
  %v469 = vpop.f32.mrf.mxu0
  %v470 = vadd.f32 0.0, %v469
  %v471 = vpop.f32.mrf.mxu0
  %v472 = vadd.f32 0.0, %v471
  %473 = vmatmul.bf16.gmra.mxu0 %v269
  %v474 = vpop.f32.mrf.mxu0
  %v475 = vadd.f32 0.0, %v474
  %v476 = vpop.f32.mrf.mxu0
  %v477 = vadd.f32 0.0, %v476
  %478 = vmatmul.bf16.gmra.mxu0 %v271
  %v479 = vpop.f32.mrf.mxu0
  %v480 = vadd.f32 0.0, %v479
  %v481 = vpop.f32.mrf.mxu0
  %v482 = vadd.f32 0.0, %v481
  %483 = vmatmul.bf16.gmra.mxu0 %v273
  %v484 = vpop.f32.mrf.mxu0
  %v485 = vadd.f32 0.0, %v484
  %v486 = vpop.f32.mrf.mxu0
  %v487 = vadd.f32 0.0, %v486
  %488 = vmatmul.bf16.gmra.mxu0 %v275
  %v489 = vpop.f32.mrf.mxu0
  %v490 = vadd.f32 0.0, %v489
  %v491 = vpop.f32.mrf.mxu0
  %v492 = vadd.f32 0.0, %v491
  %493 = vdwg.mxu0
  %494 = vmatpush.bf16.msra.mxu0 %v388
  %495 = vmatpush.bf16.msra.mxu0 %v387
  %496 = vmatpush.bf16.msra.mxu0 %v386
  %497 = vmatpush.bf16.msra.mxu0 %v385
  %498 = vmatpush.bf16.msra.mxu0 %v384
  %499 = vmatpush.bf16.msra.mxu0 %v383
  %500 = vmatpush.bf16.msra.mxu0 %v382
  %501 = vmatpush.bf16.msra.mxu0 %v381
  %502 = vmatmul.bf16.gmra.mxu0 %v246
  %v503 = vpop.f32.mrf.mxu0
  %v504 = vadd.f32 %v415, %v503
  %v505 = vpop.f32.mrf.mxu0
  %v506 = vadd.f32 %v417, %v505
  %507 = vmatmul.bf16.gmra.mxu0 %v248
  %v508 = vpop.f32.mrf.mxu0
  %v509 = vadd.f32 %v420, %v508
  %v510 = vpop.f32.mrf.mxu0
  %v511 = vadd.f32 %v422, %v510
  %512 = vmatmul.bf16.gmra.mxu0 %v250
  %v513 = vpop.f32.mrf.mxu0
  %v514 = vadd.f32 %v425, %v513
  %v515 = vpop.f32.mrf.mxu0
  %v516 = vadd.f32 %v427, %v515
  %517 = vmatmul.bf16.gmra.mxu0 %v252
  %v518 = vpop.f32.mrf.mxu0
  %v519 = vadd.f32 %v430, %v518
  %v520 = vpop.f32.mrf.mxu0
  %v521 = vadd.f32 %v432, %v520
  %522 = vmatmul.bf16.gmra.mxu0 %v254
  %v523 = vpop.f32.mrf.mxu0
  %v524 = vadd.f32 %v435, %v523
  %v525 = vpop.f32.mrf.mxu0
  %v526 = vadd.f32 %v437, %v525
  %527 = vmatmul.bf16.gmra.mxu0 %v256
  %v528 = vpop.f32.mrf.mxu0
  %v529 = vadd.f32 %v440, %v528
  %v530 = vpop.f32.mrf.mxu0
  %v531 = vadd.f32 %v442, %v530
  %532 = vmatmul.bf16.gmra.mxu0 %v258
  %v533 = vpop.f32.mrf.mxu0
  %v534 = vadd.f32 %v445, %v533
  %v535 = vpop.f32.mrf.mxu0
  %v536 = vadd.f32 %v447, %v535
  %537 = vmatmul.bf16.gmra.mxu0 %v260
  %v538 = vpop.f32.mrf.mxu0
  %v539 = vadd.f32 %v450, %v538
  %v540 = vpop.f32.mrf.mxu0
  %v541 = vadd.f32 %v452, %v540
  %542 = vmatmul.bf16.gmra.mxu0 %v262
  %v543 = vpop.f32.mrf.mxu0
  %v544 = vadd.f32 %v455, %v543
  %v545 = vpop.f32.mrf.mxu0
  %v546 = vadd.f32 %v457, %v545
  %547 = vmatmul.bf16.gmra.mxu0 %v264
  %v548 = vpop.f32.mrf.mxu0
  %v549 = vadd.f32 %v460, %v548
  %v550 = vpop.f32.mrf.mxu0
  %v551 = vadd.f32 %v462, %v550
  %552 = vmatmul.bf16.gmra.mxu0 %v266
  %v553 = vpop.f32.mrf.mxu0
  %v554 = vadd.f32 %v465, %v553
  %v555 = vpop.f32.mrf.mxu0
  %v556 = vadd.f32 %v467, %v555
  %557 = vmatmul.bf16.gmra.mxu0 %v268
  %v558 = vpop.f32.mrf.mxu0
  %v559 = vadd.f32 %v470, %v558
  %v560 = vpop.f32.mrf.mxu0
  %v561 = vadd.f32 %v472, %v560
  %562 = vmatmul.bf16.gmra.mxu0 %v270
  %v563 = vpop.f32.mrf.mxu0
  %v564 = vadd.f32 %v475, %v563
  %v565 = vpop.f32.mrf.mxu0
  %v566 = vadd.f32 %v477, %v565
  %567 = vmatmul.bf16.gmra.mxu0 %v272
  %v568 = vpop.f32.mrf.mxu0
  %v569 = vadd.f32 %v480, %v568
  %v570 = vpop.f32.mrf.mxu0
  %v571 = vadd.f32 %v482, %v570
  %572 = vmatmul.bf16.gmra.mxu0 %v274
  %v573 = vpop.f32.mrf.mxu0
  %v574 = vadd.f32 %v485, %v573
  %v575 = vpop.f32.mrf.mxu0
  %v576 = vadd.f32 %v487, %v575
  %577 = vmatmul.bf16.gmra.mxu0 %v276
  %v578 = vpop.f32.mrf.mxu0
  %v579 = vadd.f32 %v490, %v578
  %v580 = vpop.f32.mrf.mxu0
  %v581 = vadd.f32 %v492, %v580
  %582 = vdwg.mxu0
  %v583 = vadd.f32 %v53, %v504
  %v584 = vadd.f32 %v54, %v506
  %v585 = vadd.f32 %v55, %v509
  %v586 = vadd.f32 %v56, %v511
  %v587 = vadd.f32 %v57, %v514
  %v588 = vadd.f32 %v58, %v516
  %v589 = vadd.f32 %v59, %v519
  %v590 = vadd.f32 %v60, %v521
  %v591 = vadd.f32 %v61, %v524
  %v592 = vadd.f32 %v62, %v526
  %v593 = vadd.f32 %v63, %v529
  %v594 = vadd.f32 %v64, %v531
  %v595 = vadd.f32 %v65, %v534
  %v596 = vadd.f32 %v66, %v536
  %v597 = vadd.f32 %v67, %v539
  %v598 = vadd.f32 %v68, %v541
  %v599 = vadd.f32 %v69, %v544
  %v600 = vadd.f32 %v70, %v546
  %v601 = vadd.f32 %v71, %v549
  %v602 = vadd.f32 %v72, %v551
  %v603 = vadd.f32 %v73, %v554
  %v604 = vadd.f32 %v74, %v556
  %v605 = vadd.f32 %v75, %v559
  %v606 = vadd.f32 %v76, %v561
  %v607 = vadd.f32 %v77, %v564
  %v608 = vadd.f32 %v78, %v566
  %v609 = vadd.f32 %v79, %v569
  %v610 = vadd.f32 %v80, %v571
  %v611 = vadd.f32 %v81, %v574
  %v612 = vadd.f32 %v82, %v576
  %v613 = vadd.f32 %v83, %v579
  %v614 = vadd.f32 %v84, %v581
  %615 = vst [vmem:[#allocation2] sm:$0xff] %v583
  %616 = vst [vmem:[#allocation2 + $0x8] sm:$0xff] %v584
  %617 = vst [vmem:[#allocation2 + $0x10] sm:$0xff] %v585
  %618 = vst [vmem:[#allocation2 + $0x18] sm:$0xff] %v586
  %619 = vst [vmem:[#allocation2 + $0x20] sm:$0xff] %v587
  %620 = vst [vmem:[#allocation2 + $0x28] sm:$0xff] %v588
  %621 = vst [vmem:[#allocation2 + $0x30] sm:$0xff] %v589
  %622 = vst [vmem:[#allocation2 + $0x38] sm:$0xff] %v590
  %623 = vst [vmem:[#allocation2 + $0x40] sm:$0xff] %v591
  %624 = vst [vmem:[#allocation2 + $0x48] sm:$0xff] %v592
  %625 = vst [vmem:[#allocation2 + $0x50] sm:$0xff] %v593
  %626 = vst [vmem:[#allocation2 + $0x58] sm:$0xff] %v594
  %627 = vst [vmem:[#allocation2 + $0x60] sm:$0xff] %v595
  %628 = vst [vmem:[#allocation2 + $0x68] sm:$0xff] %v596
  %629 = vst [vmem:[#allocation2 + $0x70] sm:$0xff] %v597
  %630 = vst [vmem:[#allocation2 + $0x78] sm:$0xff] %v598
  %631 = vst [vmem:[#allocation2 + $0x80] sm:$0xff] %v599
  %632 = vst [vmem:[#allocation2 + $0x88] sm:$0xff] %v600
  %633 = vst [vmem:[#allocation2 + $0x90] sm:$0xff] %v601
  %634 = vst [vmem:[#allocation2 + $0x98] sm:$0xff] %v602
  %635 = vst [vmem:[#allocation2 + $0xa0] sm:$0xff] %v603
  %636 = vst [vmem:[#allocation2 + $0xa8] sm:$0xff] %v604
  %637 = vst [vmem:[#allocation2 + $0xb0] sm:$0xff] %v605
  %638 = vst [vmem:[#allocation2 + $0xb8] sm:$0xff] %v606
  %639 = vst [vmem:[#allocation2 + $0xc0] sm:$0xff] %v607
  %640 = vst [vmem:[#allocation2 + $0xc8] sm:$0xff] %v608
  %641 = vst [vmem:[#allocation2 + $0xd0] sm:$0xff] %v609
  %642 = vst [vmem:[#allocation2 + $0xd8] sm:$0xff] %v610
  %643 = vst [vmem:[#allocation2 + $0xe0] sm:$0xff] %v611
  %644 = vst [vmem:[#allocation2 + $0xe8] sm:$0xff] %v612
  %645 = vst [vmem:[#allocation2 + $0xf0] sm:$0xff] %v613
  %646 = vst [vmem:[#allocation2 + $0xf8] sm:$0xff] %v614
  // Predicated region
  $region22: #{_lambda_.2} parent=0 // pred_check
    %p647 = pneg %p17
  $region23: #{_lambda_.2} parent=0 // pred_check_branch
    %649 = sbr.rel (%p647) target = $region25
  $region24: #{_lambda_.2} parent=0 // pred_region
    %v650 = vld [vmem:[#allocation2] sm:$0xff]
    %v651 = vld [vmem:[#allocation2 + $0x8] sm:$0xff]
    %v652 = vld [vmem:[#allocation2 + $0x10] sm:$0xff]
    %v653 = vld [vmem:[#allocation2 + $0x18] sm:$0xff]
    %v654 = vld [vmem:[#allocation2 + $0x20] sm:$0xff]
    %v655 = vld [vmem:[#allocation2 + $0x28] sm:$0xff]
    %v656 = vld [vmem:[#allocation2 + $0x30] sm:$0xff]
    %v657 = vld [vmem:[#allocation2 + $0x38] sm:$0xff]
    %v658 = vld [vmem:[#allocation2 + $0x40] sm:$0xff]
    %v659 = vld [vmem:[#allocation2 + $0x48] sm:$0xff]
    %v660 = vld [vmem:[#allocation2 + $0x50] sm:$0xff]
    %v661 = vld [vmem:[#allocation2 + $0x58] sm:$0xff]
    %v662 = vld [vmem:[#allocation2 + $0x60] sm:$0xff]
    %v663 = vld [vmem:[#allocation2 + $0x68] sm:$0xff]
    %v664 = vld [vmem:[#allocation2 + $0x70] sm:$0xff]
    %v665 = vld [vmem:[#allocation2 + $0x78] sm:$0xff]
    %v666 = vld [vmem:[#allocation2 + $0x80] sm:$0xff]
    %v667 = vld [vmem:[#allocation2 + $0x88] sm:$0xff]
    %v668 = vld [vmem:[#allocation2 + $0x90] sm:$0xff]
    %v669 = vld [vmem:[#allocation2 + $0x98] sm:$0xff]
    %v670 = vld [vmem:[#allocation2 + $0xa0] sm:$0xff]
    %v671 = vld [vmem:[#allocation2 + $0xa8] sm:$0xff]
    %v672 = vld [vmem:[#allocation2 + $0xb0] sm:$0xff]
    %v673 = vld [vmem:[#allocation2 + $0xb8] sm:$0xff]
    %v674 = vld [vmem:[#allocation2 + $0xc0] sm:$0xff]
    %v675 = vld [vmem:[#allocation2 + $0xc8] sm:$0xff]
    %v676 = vld [vmem:[#allocation2 + $0xd0] sm:$0xff]
    %v677 = vld [vmem:[#allocation2 + $0xd8] sm:$0xff]
    %v678 = vld [vmem:[#allocation2 + $0xe0] sm:$0xff]
    %v679 = vld [vmem:[#allocation2 + $0xe8] sm:$0xff]
    %v680 = vld [vmem:[#allocation2 + $0xf0] sm:$0xff]
    %v681 = vld [vmem:[#allocation2 + $0xf8] sm:$0xff]
    %v682 = vld [vmem:[%s2] sm:$0x1]
    %v684 = vperm.slane %v682, 0
    %v686 = vadd.f32 %v650, %v684
    %v687 = vadd.f32 %v651, %v684
    %v688 = vadd.f32 %v652, %v684
    %v689 = vadd.f32 %v653, %v684
    %v690 = vadd.f32 %v654, %v684
    %v691 = vadd.f32 %v655, %v684
    %v692 = vadd.f32 %v656, %v684
    %v693 = vadd.f32 %v657, %v684
    %v694 = vadd.f32 %v658, %v684
    %v695 = vadd.f32 %v659, %v684
    %v696 = vadd.f32 %v660, %v684
    %v697 = vadd.f32 %v661, %v684
    %v698 = vadd.f32 %v662, %v684
    %v699 = vadd.f32 %v663, %v684
    %v700 = vadd.f32 %v664, %v684
    %v701 = vadd.f32 %v665, %v684
    %v702 = vadd.f32 %v666, %v684
    %v703 = vadd.f32 %v667, %v684
    %v704 = vadd.f32 %v668, %v684
    %v705 = vadd.f32 %v669, %v684
    %v706 = vadd.f32 %v670, %v684
    %v707 = vadd.f32 %v671, %v684
    %v708 = vadd.f32 %v672, %v684
    %v709 = vadd.f32 %v673, %v684
    %v710 = vadd.f32 %v674, %v684
    %v711 = vadd.f32 %v675, %v684
    %v712 = vadd.f32 %v676, %v684
    %v713 = vadd.f32 %v677, %v684
    %v714 = vadd.f32 %v678, %v684
    %v715 = vadd.f32 %v679, %v684
    %v716 = vadd.f32 %v680, %v684
    %v717 = vadd.f32 %v681, %v684
    %v718 = vmax.f32 %v686, 0.0
    %v719 = vmax.f32 %v687, 0.0
    %v720 = vmax.f32 %v688, 0.0
    %v721 = vmax.f32 %v689, 0.0
    %v722 = vmax.f32 %v690, 0.0
    %v723 = vmax.f32 %v691, 0.0
    %v724 = vmax.f32 %v692, 0.0
    %v725 = vmax.f32 %v693, 0.0
    %v726 = vmax.f32 %v694, 0.0
    %v727 = vmax.f32 %v695, 0.0
    %v728 = vmax.f32 %v696, 0.0
    %v729 = vmax.f32 %v697, 0.0
    %v730 = vmax.f32 %v698, 0.0
    %v731 = vmax.f32 %v699, 0.0
    %v732 = vmax.f32 %v700, 0.0
    %v733 = vmax.f32 %v701, 0.0
    %v734 = vmax.f32 %v702, 0.0
    %v735 = vmax.f32 %v703, 0.0
    %v736 = vmax.f32 %v704, 0.0
    %v737 = vmax.f32 %v705, 0.0
    %v738 = vmax.f32 %v706, 0.0
    %v739 = vmax.f32 %v707, 0.0
    %v740 = vmax.f32 %v708, 0.0
    %v741 = vmax.f32 %v709, 0.0
    %v742 = vmax.f32 %v710, 0.0
    %v743 = vmax.f32 %v711, 0.0
    %v744 = vmax.f32 %v712, 0.0
    %v745 = vmax.f32 %v713, 0.0
    %v746 = vmax.f32 %v714, 0.0
    %v747 = vmax.f32 %v715, 0.0
    %v748 = vmax.f32 %v716, 0.0
    %v749 = vmax.f32 %v717, 0.0
    %v750 = vld [vmem:[%s3] sm:$0xff]
    %v751 = vld [vmem:[%s3 + $0x8] sm:$0xff]
    %v752 = vld [vmem:[%s3 + $0x10] sm:$0xff]
    %v753 = vld [vmem:[%s3 + $0x18] sm:$0xff]
    %v754 = vld [vmem:[%s3 + $0x20] sm:$0xff]
    %v755 = vld [vmem:[%s3 + $0x28] sm:$0xff]
    %v756 = vld [vmem:[%s3 + $0x30] sm:$0xff]
    %v757 = vld [vmem:[%s3 + $0x38] sm:$0xff]
    %v758 = vld [vmem:[%s3 + $0x40] sm:$0xff]
    %v759 = vld [vmem:[%s3 + $0x48] sm:$0xff]
    %v760 = vld [vmem:[%s3 + $0x50] sm:$0xff]
    %v761 = vld [vmem:[%s3 + $0x58] sm:$0xff]
    %v762 = vld [vmem:[%s3 + $0x60] sm:$0xff]
    %v763 = vld [vmem:[%s3 + $0x68] sm:$0xff]
    %v764 = vld [vmem:[%s3 + $0x70] sm:$0xff]
    %v765 = vld [vmem:[%s3 + $0x78] sm:$0xff]
    %766 = vmatpush.msra.mxu0 %v765
    %767 = vmatpush.msra.mxu0 %v764
    %768 = vmatpush.msra.mxu0 %v763
    %769 = vmatpush.msra.mxu0 %v762
    %770 = vmatpush.msra.mxu0 %v761
    %771 = vmatpush.msra.mxu0 %v760
    %772 = vmatpush.msra.mxu0 %v759
    %773 = vmatpush.msra.mxu0 %v758
    %774 = vmatpush.msra.mxu0 %v757
    %775 = vmatpush.msra.mxu0 %v756
    %776 = vmatpush.msra.mxu0 %v755
    %777 = vmatpush.msra.mxu0 %v754
    %778 = vmatpush.msra.mxu0 %v753
    %779 = vmatpush.msra.mxu0 %v752
    %780 = vmatpush.msra.mxu0 %v751
    %781 = vmatpush.msra.mxu0 %v750
    %782 = vmatmul.f32.gmra.mxu0 %v718
    %v783 = vpop.f32.mrf.mxu0
    %v784 = vadd.f32 0.0, %v783
    %785 = vmatmul.f32.gmra.mxu0 %v719
    %v786 = vpop.f32.mrf.mxu0
    %v787 = vadd.f32 0.0, %v786
    %788 = vmatmul.f32.gmra.mxu0 %v720
    %v789 = vpop.f32.mrf.mxu0
    %v790 = vadd.f32 0.0, %v789
    %791 = vmatmul.f32.gmra.mxu0 %v721
    %v792 = vpop.f32.mrf.mxu0
    %v793 = vadd.f32 0.0, %v792
    %794 = vmatmul.f32.gmra.mxu0 %v722
    %v795 = vpop.f32.mrf.mxu0
    %v796 = vadd.f32 0.0, %v795
    %797 = vmatmul.f32.gmra.mxu0 %v723
    %v798 = vpop.f32.mrf.mxu0
    %v799 = vadd.f32 0.0, %v798
    %800 = vmatmul.f32.gmra.mxu0 %v724
    %v801 = vpop.f32.mrf.mxu0
    %v802 = vadd.f32 0.0, %v801
    %803 = vmatmul.f32.gmra.mxu0 %v725
    %v804 = vpop.f32.mrf.mxu0
    %v805 = vadd.f32 0.0, %v804
    %806 = vmatmul.f32.gmra.mxu0 %v726
    %v807 = vpop.f32.mrf.mxu0
    %v808 = vadd.f32 0.0, %v807
    %809 = vmatmul.f32.gmra.mxu0 %v727
    %v810 = vpop.f32.mrf.mxu0
    %v811 = vadd.f32 0.0, %v810
    %812 = vmatmul.f32.gmra.mxu0 %v728
    %v813 = vpop.f32.mrf.mxu0
    %v814 = vadd.f32 0.0, %v813
    %815 = vmatmul.f32.gmra.mxu0 %v729
    %v816 = vpop.f32.mrf.mxu0
    %v817 = vadd.f32 0.0, %v816
    %818 = vmatmul.f32.gmra.mxu0 %v730
    %v819 = vpop.f32.mrf.mxu0
    %v820 = vadd.f32 0.0, %v819
    %821 = vmatmul.f32.gmra.mxu0 %v731
    %v822 = vpop.f32.mrf.mxu0
    %v823 = vadd.f32 0.0, %v822
    %824 = vmatmul.f32.gmra.mxu0 %v732
    %v825 = vpop.f32.mrf.mxu0
    %v826 = vadd.f32 0.0, %v825
    %827 = vmatmul.f32.gmra.mxu0 %v733
    %v828 = vpop.f32.mrf.mxu0
    %v829 = vadd.f32 0.0, %v828
    %830 = vmatmul.f32.gmra.mxu0 %v734
    %v831 = vpop.f32.mrf.mxu0
    %v832 = vadd.f32 0.0, %v831
    %833 = vmatmul.f32.gmra.mxu0 %v735
    %v834 = vpop.f32.mrf.mxu0
    %v835 = vadd.f32 0.0, %v834
    %836 = vmatmul.f32.gmra.mxu0 %v736
    %v837 = vpop.f32.mrf.mxu0
    %v838 = vadd.f32 0.0, %v837
    %839 = vmatmul.f32.gmra.mxu0 %v737
    %v840 = vpop.f32.mrf.mxu0
    %v841 = vadd.f32 0.0, %v840
    %842 = vmatmul.f32.gmra.mxu0 %v738
    %v843 = vpop.f32.mrf.mxu0
    %v844 = vadd.f32 0.0, %v843
    %845 = vmatmul.f32.gmra.mxu0 %v739
    %v846 = vpop.f32.mrf.mxu0
    %v847 = vadd.f32 0.0, %v846
    %848 = vmatmul.f32.gmra.mxu0 %v740
    %v849 = vpop.f32.mrf.mxu0
    %v850 = vadd.f32 0.0, %v849
    %851 = vmatmul.f32.gmra.mxu0 %v741
    %v852 = vpop.f32.mrf.mxu0
    %v853 = vadd.f32 0.0, %v852
    %854 = vmatmul.f32.gmra.mxu0 %v742
    %v855 = vpop.f32.mrf.mxu0
    %v856 = vadd.f32 0.0, %v855
    %857 = vmatmul.f32.gmra.mxu0 %v743
    %v858 = vpop.f32.mrf.mxu0
    %v859 = vadd.f32 0.0, %v858
    %860 = vmatmul.f32.gmra.mxu0 %v744
    %v861 = vpop.f32.mrf.mxu0
    %v862 = vadd.f32 0.0, %v861
    %863 = vmatmul.f32.gmra.mxu0 %v745
    %v864 = vpop.f32.mrf.mxu0
    %v865 = vadd.f32 0.0, %v864
    %866 = vmatmul.f32.gmra.mxu0 %v746
    %v867 = vpop.f32.mrf.mxu0
    %v868 = vadd.f32 0.0, %v867
    %869 = vmatmul.f32.gmra.mxu0 %v747
    %v870 = vpop.f32.mrf.mxu0
    %v871 = vadd.f32 0.0, %v870
    %872 = vmatmul.f32.gmra.mxu0 %v748
    %v873 = vpop.f32.mrf.mxu0
    %v874 = vadd.f32 0.0, %v873
    %875 = vmatmul.f32.gmra.mxu0 %v749
    %v876 = vpop.f32.mrf.mxu0
    %v877 = vadd.f32 0.0, %v876
    %878 = vdwg.mxu0
    %v879 = vpack.c.bf16 %v784, %v784
    %v880 = vpack.c.bf16 %v787, %v787
    %v881 = vpack.c.bf16 %v790, %v790
    %v882 = vpack.c.bf16 %v793, %v793
    %v883 = vpack.c.bf16 %v796, %v796
    %v884 = vpack.c.bf16 %v799, %v799
    %v885 = vpack.c.bf16 %v802, %v802
    %v886 = vpack.c.bf16 %v805, %v805
    %v887 = vpack.c.bf16 %v808, %v808
    %v888 = vpack.c.bf16 %v811, %v811
    %v889 = vpack.c.bf16 %v814, %v814
    %v890 = vpack.c.bf16 %v817, %v817
    %v891 = vpack.c.bf16 %v820, %v820
    %v892 = vpack.c.bf16 %v823, %v823
    %v893 = vpack.c.bf16 %v826, %v826
    %v894 = vpack.c.bf16 %v829, %v829
    %v895 = vpack.c.bf16 %v832, %v832
    %v896 = vpack.c.bf16 %v835, %v835
    %v897 = vpack.c.bf16 %v838, %v838
    %v898 = vpack.c.bf16 %v841, %v841
    %v899 = vpack.c.bf16 %v844, %v844
    %v900 = vpack.c.bf16 %v847, %v847
    %v901 = vpack.c.bf16 %v850, %v850
    %v902 = vpack.c.bf16 %v853, %v853
    %v903 = vpack.c.bf16 %v856, %v856
    %v904 = vpack.c.bf16 %v859, %v859
    %v905 = vpack.c.bf16 %v862, %v862
    %v906 = vpack.c.bf16 %v865, %v865
    %v907 = vpack.c.bf16 %v868, %v868
    %v908 = vpack.c.bf16 %v871, %v871
    %v909 = vpack.c.bf16 %v874, %v874
    %v910 = vpack.c.bf16 %v877, %v877
    %911 = vst [vmem:[%s4] sm:$0xf] %v879
    %912 = vst [vmem:[%s4 + $0x4] sm:$0xf] %v880
    %913 = vst [vmem:[%s4 + $0x8] sm:$0xf] %v881
    %914 = vst [vmem:[%s4 + $0xc] sm:$0xf] %v882
    %915 = vst [vmem:[%s4 + $0x10] sm:$0xf] %v883
    %916 = vst [vmem:[%s4 + $0x14] sm:$0xf] %v884
    %917 = vst [vmem:[%s4 + $0x18] sm:$0xf] %v885
    %918 = vst [vmem:[%s4 + $0x1c] sm:$0xf] %v886
    %919 = vst [vmem:[%s4 + $0x20] sm:$0xf] %v887
    %920 = vst [vmem:[%s4 + $0x24] sm:$0xf] %v888
    %921 = vst [vmem:[%s4 + $0x28] sm:$0xf] %v889
    %922 = vst [vmem:[%s4 + $0x2c] sm:$0xf] %v890
    %923 = vst [vmem:[%s4 + $0x30] sm:$0xf] %v891
    %924 = vst [vmem:[%s4 + $0x34] sm:$0xf] %v892
    %925 = vst [vmem:[%s4 + $0x38] sm:$0xf] %v893
    %926 = vst [vmem:[%s4 + $0x3c] sm:$0xf] %v894
    %927 = vst [vmem:[%s4 + $0x40] sm:$0xf] %v895
    %928 = vst [vmem:[%s4 + $0x44] sm:$0xf] %v896
    %929 = vst [vmem:[%s4 + $0x48] sm:$0xf] %v897
    %930 = vst [vmem:[%s4 + $0x4c] sm:$0xf] %v898
    %931 = vst [vmem:[%s4 + $0x50] sm:$0xf] %v899
    %932 = vst [vmem:[%s4 + $0x54] sm:$0xf] %v900
    %933 = vst [vmem:[%s4 + $0x58] sm:$0xf] %v901
    %934 = vst [vmem:[%s4 + $0x5c] sm:$0xf] %v902
    %935 = vst [vmem:[%s4 + $0x60] sm:$0xf] %v903
    %936 = vst [vmem:[%s4 + $0x64] sm:$0xf] %v904
    %937 = vst [vmem:[%s4 + $0x68] sm:$0xf] %v905
    %938 = vst [vmem:[%s4 + $0x6c] sm:$0xf] %v906
    %939 = vst [vmem:[%s4 + $0x70] sm:$0xf] %v907
    %940 = vst [vmem:[%s4 + $0x74] sm:$0xf] %v908
    %941 = vst [vmem:[%s4 + $0x78] sm:$0xf] %v909
    %942 = vst [vmem:[%s4 + $0x7c] sm:$0xf] %v910
  $region25: #{_lambda_.2} parent=0 // pred_fallthru
    _
  // Predicated region
  $region26: #{_lambda_.2} parent=0 // pred_check
    _
  $region27: #{_lambda_.2} parent=0 // pred_check_branch
    %944 = sbr.rel (0) target = $region29
  $region28: #{_lambda_.2} parent=0 // pred_region
    _
  $region29: #{_lambda_.2} parent=0 // pred_fallthru
    _
  // Predicated region
  $region30: #{_lambda_.2} parent=0 // pred_check
    _
  $region31: #{_lambda_.2} parent=0 // pred_check_branch
    %946 = sbr.rel (0) target = $region33
  $region32: #{_lambda_.2} parent=0 // pred_region
    _
  $region33: #{_lambda_.2} parent=0 // pred_fallthru
    _

// kernel: _lambda_.3
$region0: #{_lambda_.3}
  #allocation0 [shape = 'u32[]', space=smem, size = 0x4, offset = 0x4, fixed_abs, tag = 'smem constant byte address 0x4 - core index']
  #allocation1 [shape = 'u32[72,128]{1,0:T(1,128)}', space=vmem, size = 0x9000, scoped, tag = 'internal scratch']
  #allocation2 [shape = 'f32[256,128]{1,0:T(8,128)}', space=vmem, size = 0x20000, scoped, tag = 'scratch operand']
  %s0 = inlined_call_operand.vmem [shape: bf16[256,256], index: 0, kind: input, shape index: {}]
  %s1 = inlined_call_operand.vmem [shape: bf16[256,128], index: 1, kind: input, shape index: {}]
  %s2 = inlined_call_operand.vmem [shape: f32[1,128], index: 2, kind: input, shape index: {}]
  %s3 = inlined_call_operand.vmem [shape: f32[256,128], index: 3, kind: output, shape index: {}]
  %s4 = sld [smem:[#allocation0]]
  $region30: #{_lambda_.3} parent=0
    _
  %s6 = ssub.s32 1, %s4
  %s7 = scalar_select 0, %s6, %s4
  // Predicated region
  $region2: #{_lambda_.3} parent=0 // pred_check
    _
  $region3: #{_lambda_.3} parent=0 // pred_check_branch
    %9 = sbr.rel (0) target = $region5
  $region4: #{_lambda_.3} parent=0 // pred_region
    _
  $region5: #{_lambda_.3} parent=0 // pred_fallthru
    _
  // Predicated region
  $region6: #{_lambda_.3} parent=0 // pred_check
    _
  $region7: #{_lambda_.3} parent=0 // pred_check_branch
    %11 = sbr.rel (0) target = $region9
  $region8: #{_lambda_.3} parent=0 // pred_region
    _
  $region9: #{_lambda_.3} parent=0 // pred_fallthru
    _
  // Predicated region
  $region10: #{_lambda_.3} parent=0 // pred_check
    _
  $region11: #{_lambda_.3} parent=0 // pred_check_branch
    %13 = sbr.rel (0) target = $region13
  $region12: #{_lambda_.3} parent=0 // pred_region
    _
  $region13: #{_lambda_.3} parent=0 // pred_fallthru
    _
  %p14 = scmp.eq.s32.totalorder 0, 0
  // Predicated region
  $region14: #{_lambda_.3} parent=0 // pred_check
    %p15 = pneg %p14
  $region15: #{_lambda_.3} parent=0 // pred_check_branch
    %17 = sbr.rel (%p15) target = $region17
  $region16: #{_lambda_.3} parent=0 // pred_region
    %18 = vst [vmem:[#allocation2] sm:$0xff] 0.0
    %19 = vst [vmem:[#allocation2 + $0x8] sm:$0xff] 0.0
    %20 = vst [vmem:[#allocation2 + $0x10] sm:$0xff] 0.0
    %21 = vst [vmem:[#allocation2 + $0x18] sm:$0xff] 0.0
    %22 = vst [vmem:[#allocation2 + $0x20] sm:$0xff] 0.0
    %23 = vst [vmem:[#allocation2 + $0x28] sm:$0xff] 0.0
    %24 = vst [vmem:[#allocation2 + $0x30] sm:$0xff] 0.0
    %25 = vst [vmem:[#allocation2 + $0x38] sm:$0xff] 0.0
    %26 = vst [vmem:[#allocation2 + $0x40] sm:$0xff] 0.0
    %27 = vst [vmem:[#allocation2 + $0x48] sm:$0xff] 0.0
    %28 = vst [vmem:[#allocation2 + $0x50] sm:$0xff] 0.0
    %29 = vst [vmem:[#allocation2 + $0x58] sm:$0xff] 0.0
    %30 = vst [vmem:[#allocation2 + $0x60] sm:$0xff] 0.0
    %31 = vst [vmem:[#allocation2 + $0x68] sm:$0xff] 0.0
    %32 = vst [vmem:[#allocation2 + $0x70] sm:$0xff] 0.0
    %33 = vst [vmem:[#allocation2 + $0x78] sm:$0xff] 0.0
    %34 = vst [vmem:[#allocation2 + $0x80] sm:$0xff] 0.0
    %35 = vst [vmem:[#allocation2 + $0x88] sm:$0xff] 0.0
    %36 = vst [vmem:[#allocation2 + $0x90] sm:$0xff] 0.0
    %37 = vst [vmem:[#allocation2 + $0x98] sm:$0xff] 0.0
    %38 = vst [vmem:[#allocation2 + $0xa0] sm:$0xff] 0.0
    %39 = vst [vmem:[#allocation2 + $0xa8] sm:$0xff] 0.0
    %40 = vst [vmem:[#allocation2 + $0xb0] sm:$0xff] 0.0
    %41 = vst [vmem:[#allocation2 + $0xb8] sm:$0xff] 0.0
    %42 = vst [vmem:[#allocation2 + $0xc0] sm:$0xff] 0.0
    %43 = vst [vmem:[#allocation2 + $0xc8] sm:$0xff] 0.0
    %44 = vst [vmem:[#allocation2 + $0xd0] sm:$0xff] 0.0
    %45 = vst [vmem:[#allocation2 + $0xd8] sm:$0xff] 0.0
    %46 = vst [vmem:[#allocation2 + $0xe0] sm:$0xff] 0.0
    %47 = vst [vmem:[#allocation2 + $0xe8] sm:$0xff] 0.0
    %48 = vst [vmem:[#allocation2 + $0xf0] sm:$0xff] 0.0
    %49 = vst [vmem:[#allocation2 + $0xf8] sm:$0xff] 0.0
  $region17: #{_lambda_.3} parent=0 // pred_fallthru
    _
  %v50 = vld [vmem:[#allocation2] sm:$0xff]
  %v51 = vld [vmem:[#allocation2 + $0x8] sm:$0xff]
  %v52 = vld [vmem:[#allocation2 + $0x10] sm:$0xff]
  %v53 = vld [vmem:[#allocation2 + $0x18] sm:$0xff]
  %v54 = vld [vmem:[#allocation2 + $0x20] sm:$0xff]
  %v55 = vld [vmem:[#allocation2 + $0x28] sm:$0xff]
  %v56 = vld [vmem:[#allocation2 + $0x30] sm:$0xff]
  %v57 = vld [vmem:[#allocation2 + $0x38] sm:$0xff]
  %v58 = vld [vmem:[#allocation2 + $0x40] sm:$0xff]
  %v59 = vld [vmem:[#allocation2 + $0x48] sm:$0xff]
  %v60 = vld [vmem:[#allocation2 + $0x50] sm:$0xff]
  %v61 = vld [vmem:[#allocation2 + $0x58] sm:$0xff]
  %v62 = vld [vmem:[#allocation2 + $0x60] sm:$0xff]
  %v63 = vld [vmem:[#allocation2 + $0x68] sm:$0xff]
  %v64 = vld [vmem:[#allocation2 + $0x70] sm:$0xff]
  %v65 = vld [vmem:[#allocation2 + $0x78] sm:$0xff]
  %v66 = vld [vmem:[#allocation2 + $0x80] sm:$0xff]
  %v67 = vld [vmem:[#allocation2 + $0x88] sm:$0xff]
  %v68 = vld [vmem:[#allocation2 + $0x90] sm:$0xff]
  %v69 = vld [vmem:[#allocation2 + $0x98] sm:$0xff]
  %v70 = vld [vmem:[#allocation2 + $0xa0] sm:$0xff]
  %v71 = vld [vmem:[#allocation2 + $0xa8] sm:$0xff]
  %v72 = vld [vmem:[#allocation2 + $0xb0] sm:$0xff]
  %v73 = vld [vmem:[#allocation2 + $0xb8] sm:$0xff]
  %v74 = vld [vmem:[#allocation2 + $0xc0] sm:$0xff]
  %v75 = vld [vmem:[#allocation2 + $0xc8] sm:$0xff]
  %v76 = vld [vmem:[#allocation2 + $0xd0] sm:$0xff]
  %v77 = vld [vmem:[#allocation2 + $0xd8] sm:$0xff]
  %v78 = vld [vmem:[#allocation2 + $0xe0] sm:$0xff]
  %v79 = vld [vmem:[#allocation2 + $0xe8] sm:$0xff]
  %v80 = vld [vmem:[#allocation2 + $0xf0] sm:$0xff]
  %v81 = vld [vmem:[#allocation2 + $0xf8] sm:$0xff]
  %v82 = vld [vmem:[%s0] sm:$0xff]
  %v83 = vld [vmem:[%s0 + $0x8] sm:$0xff]
  %v84 = vld [vmem:[%s0 + $0x10] sm:$0xff]
  %v85 = vld [vmem:[%s0 + $0x18] sm:$0xff]
  %v86 = vld [vmem:[%s0 + $0x20] sm:$0xff]
  %v87 = vld [vmem:[%s0 + $0x28] sm:$0xff]
  %v88 = vld [vmem:[%s0 + $0x30] sm:$0xff]
  %v89 = vld [vmem:[%s0 + $0x38] sm:$0xff]
  %v90 = vld [vmem:[%s0 + $0x40] sm:$0xff]
  %v91 = vld [vmem:[%s0 + $0x48] sm:$0xff]
  %v92 = vld [vmem:[%s0 + $0x50] sm:$0xff]
  %v93 = vld [vmem:[%s0 + $0x58] sm:$0xff]
  %v94 = vld [vmem:[%s0 + $0x60] sm:$0xff]
  %v95 = vld [vmem:[%s0 + $0x68] sm:$0xff]
  %v96 = vld [vmem:[%s0 + $0x70] sm:$0xff]
  %v97 = vld [vmem:[%s0 + $0x78] sm:$0xff]
  %v98 = vld [vmem:[%s0 + $0x80] sm:$0xff]
  %v99 = vld [vmem:[%s0 + $0x88] sm:$0xff]
  %v100 = vld [vmem:[%s0 + $0x90] sm:$0xff]
  %v101 = vld [vmem:[%s0 + $0x98] sm:$0xff]
  %v102 = vld [vmem:[%s0 + $0xa0] sm:$0xff]
  %v103 = vld [vmem:[%s0 + $0xa8] sm:$0xff]
  %v104 = vld [vmem:[%s0 + $0xb0] sm:$0xff]
  %v105 = vld [vmem:[%s0 + $0xb8] sm:$0xff]
  %v106 = vld [vmem:[%s0 + $0xc0] sm:$0xff]
  %v107 = vld [vmem:[%s0 + $0xc8] sm:$0xff]
  %v108 = vld [vmem:[%s0 + $0xd0] sm:$0xff]
  %v109 = vld [vmem:[%s0 + $0xd8] sm:$0xff]
  %v110 = vld [vmem:[%s0 + $0xe0] sm:$0xff]
  %v111 = vld [vmem:[%s0 + $0xe8] sm:$0xff]
  %v112 = vld [vmem:[%s0 + $0xf0] sm:$0xff]
  %v113 = vld [vmem:[%s0 + $0xf8] sm:$0xff]
  %v114 = vld [vmem:[%s1] sm:$0xf]
  %v115 = vld [vmem:[%s1 + $0x4] sm:$0xf]
  %v116 = vld [vmem:[%s1 + $0x8] sm:$0xf]
  %v117 = vld [vmem:[%s1 + $0xc] sm:$0xf]
  %v118 = vld [vmem:[%s1 + $0x10] sm:$0xf]
  %v119 = vld [vmem:[%s1 + $0x14] sm:$0xf]
  %v120 = vld [vmem:[%s1 + $0x18] sm:$0xf]
  %v121 = vld [vmem:[%s1 + $0x1c] sm:$0xf]
  %v122 = vld [vmem:[%s1 + $0x20] sm:$0xf]
  %v123 = vld [vmem:[%s1 + $0x24] sm:$0xf]
  %v124 = vld [vmem:[%s1 + $0x28] sm:$0xf]
  %v125 = vld [vmem:[%s1 + $0x2c] sm:$0xf]
  %v126 = vld [vmem:[%s1 + $0x30] sm:$0xf]
  %v127 = vld [vmem:[%s1 + $0x34] sm:$0xf]
  %v128 = vld [vmem:[%s1 + $0x38] sm:$0xf]
  %v129 = vld [vmem:[%s1 + $0x3c] sm:$0xf]
  %v130 = vld [vmem:[%s1 + $0x40] sm:$0xf]
  %v131 = vld [vmem:[%s1 + $0x44] sm:$0xf]
  %v132 = vld [vmem:[%s1 + $0x48] sm:$0xf]
  %v133 = vld [vmem:[%s1 + $0x4c] sm:$0xf]
  %v134 = vld [vmem:[%s1 + $0x50] sm:$0xf]
  %v135 = vld [vmem:[%s1 + $0x54] sm:$0xf]
  %v136 = vld [vmem:[%s1 + $0x58] sm:$0xf]
  %v137 = vld [vmem:[%s1 + $0x5c] sm:$0xf]
  %v138 = vld [vmem:[%s1 + $0x60] sm:$0xf]
  %v139 = vld [vmem:[%s1 + $0x64] sm:$0xf]
  %v140 = vld [vmem:[%s1 + $0x68] sm:$0xf]
  %v141 = vld [vmem:[%s1 + $0x6c] sm:$0xf]
  %v142 = vld [vmem:[%s1 + $0x70] sm:$0xf]
  %v143 = vld [vmem:[%s1 + $0x74] sm:$0xf]
  %v144 = vld [vmem:[%s1 + $0x78] sm:$0xf]
  %v145 = vld [vmem:[%s1 + $0x7c] sm:$0xf]
  %v178 = vunpack.c.l.b16 %v82
  %v179 = vunpack.c.h.b16 %v82
  %v180 = vunpack.c.l.b16 %v83
  %v181 = vunpack.c.h.b16 %v83
  %v182 = vunpack.c.l.b16 %v84
  %v183 = vunpack.c.h.b16 %v84
  %v184 = vunpack.c.l.b16 %v85
  %v185 = vunpack.c.h.b16 %v85
  %v186 = vunpack.c.l.b16 %v86
  %v187 = vunpack.c.h.b16 %v86
  %v188 = vunpack.c.l.b16 %v87
  %v189 = vunpack.c.h.b16 %v87
  %v190 = vunpack.c.l.b16 %v88
  %v191 = vunpack.c.h.b16 %v88
  %v192 = vunpack.c.l.b16 %v89
  %v193 = vunpack.c.h.b16 %v89
  %v194 = vunpack.c.l.b16 %v90
  %v195 = vunpack.c.h.b16 %v90
  %v196 = vunpack.c.l.b16 %v91
  %v197 = vunpack.c.h.b16 %v91
  %v198 = vunpack.c.l.b16 %v92
  %v199 = vunpack.c.h.b16 %v92
  %v200 = vunpack.c.l.b16 %v93
  %v201 = vunpack.c.h.b16 %v93
  %v202 = vunpack.c.l.b16 %v94
  %v203 = vunpack.c.h.b16 %v94
  %v204 = vunpack.c.l.b16 %v95
  %v205 = vunpack.c.h.b16 %v95
  %v206 = vunpack.c.l.b16 %v96
  %v207 = vunpack.c.h.b16 %v96
  %v208 = vunpack.c.l.b16 %v97
  %v209 = vunpack.c.h.b16 %v97
  %v210 = vunpack.c.l.b16 %v98
  %v211 = vunpack.c.h.b16 %v98
  %v212 = vunpack.c.l.b16 %v99
  %v213 = vunpack.c.h.b16 %v99
  %v214 = vunpack.c.l.b16 %v100
  %v215 = vunpack.c.h.b16 %v100
  %v216 = vunpack.c.l.b16 %v101
  %v217 = vunpack.c.h.b16 %v101
  %v218 = vunpack.c.l.b16 %v102
  %v219 = vunpack.c.h.b16 %v102
  %v220 = vunpack.c.l.b16 %v103
  %v221 = vunpack.c.h.b16 %v103
  %v222 = vunpack.c.l.b16 %v104
  %v223 = vunpack.c.h.b16 %v104
  %v224 = vunpack.c.l.b16 %v105
  %v225 = vunpack.c.h.b16 %v105
  %v226 = vunpack.c.l.b16 %v106
  %v227 = vunpack.c.h.b16 %v106
  %v228 = vunpack.c.l.b16 %v107
  %v229 = vunpack.c.h.b16 %v107
  %v230 = vunpack.c.l.b16 %v108
  %v231 = vunpack.c.h.b16 %v108
  %v232 = vunpack.c.l.b16 %v109
  %v233 = vunpack.c.h.b16 %v109
  %v234 = vunpack.c.l.b16 %v110
  %v235 = vunpack.c.h.b16 %v110
  %v236 = vunpack.c.l.b16 %v111
  %v237 = vunpack.c.h.b16 %v111
  %v238 = vunpack.c.l.b16 %v112
  %v239 = vunpack.c.h.b16 %v112
  %v240 = vunpack.c.l.b16 %v113
  %v241 = vunpack.c.h.b16 %v113
  %v242 = vpack.c.b16 %v180, %v178
  %v243 = vpack.c.b16 %v181, %v179
  %v244 = vpack.c.b16 %v184, %v182
  %v245 = vpack.c.b16 %v185, %v183
  %v246 = vpack.c.b16 %v188, %v186
  %v247 = vpack.c.b16 %v189, %v187
  %v248 = vpack.c.b16 %v192, %v190
  %v249 = vpack.c.b16 %v193, %v191
  %v250 = vpack.c.b16 %v196, %v194
  %v251 = vpack.c.b16 %v197, %v195
  %v252 = vpack.c.b16 %v200, %v198
  %v253 = vpack.c.b16 %v201, %v199
  %v254 = vpack.c.b16 %v204, %v202
  %v255 = vpack.c.b16 %v205, %v203
  %v256 = vpack.c.b16 %v208, %v206
  %v257 = vpack.c.b16 %v209, %v207
  %v258 = vpack.c.b16 %v212, %v210
  %v259 = vpack.c.b16 %v213, %v211
  %v260 = vpack.c.b16 %v216, %v214
  %v261 = vpack.c.b16 %v217, %v215
  %v262 = vpack.c.b16 %v220, %v218
  %v263 = vpack.c.b16 %v221, %v219
  %v264 = vpack.c.b16 %v224, %v222
  %v265 = vpack.c.b16 %v225, %v223
  %v266 = vpack.c.b16 %v228, %v226
  %v267 = vpack.c.b16 %v229, %v227
  %v268 = vpack.c.b16 %v232, %v230
  %v269 = vpack.c.b16 %v233, %v231
  %v270 = vpack.c.b16 %v236, %v234
  %v271 = vpack.c.b16 %v237, %v235
  %v272 = vpack.c.b16 %v240, %v238
  %v273 = vpack.c.b16 %v241, %v239
  %v338 = vunpack.c.l.b16 %v114
  %v339 = vunpack.c.l.b16 %v115
  %v340 = vunpack.c.l.b16 %v116
  %v341 = vunpack.c.l.b16 %v117
  %v342 = vunpack.c.l.b16 %v118
  %v343 = vunpack.c.l.b16 %v119
  %v344 = vunpack.c.l.b16 %v120
  %v345 = vunpack.c.l.b16 %v121
  %v346 = vunpack.c.l.b16 %v122
  %v347 = vunpack.c.l.b16 %v123
  %v348 = vunpack.c.l.b16 %v124
  %v349 = vunpack.c.l.b16 %v125
  %v350 = vunpack.c.l.b16 %v126
  %v351 = vunpack.c.l.b16 %v127
  %v352 = vunpack.c.l.b16 %v128
  %v353 = vunpack.c.l.b16 %v129
  %v354 = vunpack.c.l.b16 %v130
  %v355 = vunpack.c.l.b16 %v131
  %v356 = vunpack.c.l.b16 %v132
  %v357 = vunpack.c.l.b16 %v133
  %v358 = vunpack.c.l.b16 %v134
  %v359 = vunpack.c.l.b16 %v135
  %v360 = vunpack.c.l.b16 %v136
  %v361 = vunpack.c.l.b16 %v137
  %v362 = vunpack.c.l.b16 %v138
  %v363 = vunpack.c.l.b16 %v139
  %v364 = vunpack.c.l.b16 %v140
  %v365 = vunpack.c.l.b16 %v141
  %v366 = vunpack.c.l.b16 %v142
  %v367 = vunpack.c.l.b16 %v143
  %v368 = vunpack.c.l.b16 %v144
  %v369 = vunpack.c.l.b16 %v145
  %v370 = vpack.c.b16 %v339, %v338
  %v371 = vpack.c.b16 %v341, %v340
  %v372 = vpack.c.b16 %v343, %v342
  %v373 = vpack.c.b16 %v345, %v344
  %v374 = vpack.c.b16 %v347, %v346
  %v375 = vpack.c.b16 %v349, %v348
  %v376 = vpack.c.b16 %v351, %v350
  %v377 = vpack.c.b16 %v353, %v352
  %v378 = vpack.c.b16 %v355, %v354
  %v379 = vpack.c.b16 %v357, %v356
  %v380 = vpack.c.b16 %v359, %v358
  %v381 = vpack.c.b16 %v361, %v360
  %v382 = vpack.c.b16 %v363, %v362
  %v383 = vpack.c.b16 %v365, %v364
  %v384 = vpack.c.b16 %v367, %v366
  %v385 = vpack.c.b16 %v369, %v368
  %402 = vmatpush.bf16.msra.mxu0 %v377
  %403 = vmatpush.bf16.msra.mxu0 %v376
  %404 = vmatpush.bf16.msra.mxu0 %v375
  %405 = vmatpush.bf16.msra.mxu0 %v374
  %406 = vmatpush.bf16.msra.mxu0 %v373
  %407 = vmatpush.bf16.msra.mxu0 %v372
  %408 = vmatpush.bf16.msra.mxu0 %v371
  %409 = vmatpush.bf16.msra.mxu0 %v370
  %410 = vmatmul.bf16.gmra.mxu0 %v242
  %v411 = vpop.f32.mrf.mxu0
  %v412 = vadd.f32 0.0, %v411
  %v413 = vpop.f32.mrf.mxu0
  %v414 = vadd.f32 0.0, %v413
  %415 = vmatmul.bf16.gmra.mxu0 %v244
  %v416 = vpop.f32.mrf.mxu0
  %v417 = vadd.f32 0.0, %v416
  %v418 = vpop.f32.mrf.mxu0
  %v419 = vadd.f32 0.0, %v418
  %420 = vmatmul.bf16.gmra.mxu0 %v246
  %v421 = vpop.f32.mrf.mxu0
  %v422 = vadd.f32 0.0, %v421
  %v423 = vpop.f32.mrf.mxu0
  %v424 = vadd.f32 0.0, %v423
  %425 = vmatmul.bf16.gmra.mxu0 %v248
  %v426 = vpop.f32.mrf.mxu0
  %v427 = vadd.f32 0.0, %v426
  %v428 = vpop.f32.mrf.mxu0
  %v429 = vadd.f32 0.0, %v428
  %430 = vmatmul.bf16.gmra.mxu0 %v250
  %v431 = vpop.f32.mrf.mxu0
  %v432 = vadd.f32 0.0, %v431
  %v433 = vpop.f32.mrf.mxu0
  %v434 = vadd.f32 0.0, %v433
  %435 = vmatmul.bf16.gmra.mxu0 %v252
  %v436 = vpop.f32.mrf.mxu0
  %v437 = vadd.f32 0.0, %v436
  %v438 = vpop.f32.mrf.mxu0
  %v439 = vadd.f32 0.0, %v438
  %440 = vmatmul.bf16.gmra.mxu0 %v254
  %v441 = vpop.f32.mrf.mxu0
  %v442 = vadd.f32 0.0, %v441
  %v443 = vpop.f32.mrf.mxu0
  %v444 = vadd.f32 0.0, %v443
  %445 = vmatmul.bf16.gmra.mxu0 %v256
  %v446 = vpop.f32.mrf.mxu0
  %v447 = vadd.f32 0.0, %v446
  %v448 = vpop.f32.mrf.mxu0
  %v449 = vadd.f32 0.0, %v448
  %450 = vmatmul.bf16.gmra.mxu0 %v258
  %v451 = vpop.f32.mrf.mxu0
  %v452 = vadd.f32 0.0, %v451
  %v453 = vpop.f32.mrf.mxu0
  %v454 = vadd.f32 0.0, %v453
  %455 = vmatmul.bf16.gmra.mxu0 %v260
  %v456 = vpop.f32.mrf.mxu0
  %v457 = vadd.f32 0.0, %v456
  %v458 = vpop.f32.mrf.mxu0
  %v459 = vadd.f32 0.0, %v458
  %460 = vmatmul.bf16.gmra.mxu0 %v262
  %v461 = vpop.f32.mrf.mxu0
  %v462 = vadd.f32 0.0, %v461
  %v463 = vpop.f32.mrf.mxu0
  %v464 = vadd.f32 0.0, %v463
  %465 = vmatmul.bf16.gmra.mxu0 %v264
  %v466 = vpop.f32.mrf.mxu0
  %v467 = vadd.f32 0.0, %v466
  %v468 = vpop.f32.mrf.mxu0
  %v469 = vadd.f32 0.0, %v468
  %470 = vmatmul.bf16.gmra.mxu0 %v266
  %v471 = vpop.f32.mrf.mxu0
  %v472 = vadd.f32 0.0, %v471
  %v473 = vpop.f32.mrf.mxu0
  %v474 = vadd.f32 0.0, %v473
  %475 = vmatmul.bf16.gmra.mxu0 %v268
  %v476 = vpop.f32.mrf.mxu0
  %v477 = vadd.f32 0.0, %v476
  %v478 = vpop.f32.mrf.mxu0
  %v479 = vadd.f32 0.0, %v478
  %480 = vmatmul.bf16.gmra.mxu0 %v270
  %v481 = vpop.f32.mrf.mxu0
  %v482 = vadd.f32 0.0, %v481
  %v483 = vpop.f32.mrf.mxu0
  %v484 = vadd.f32 0.0, %v483
  %485 = vmatmul.bf16.gmra.mxu0 %v272
  %v486 = vpop.f32.mrf.mxu0
  %v487 = vadd.f32 0.0, %v486
  %v488 = vpop.f32.mrf.mxu0
  %v489 = vadd.f32 0.0, %v488
  %490 = vdwg.mxu0
  %491 = vmatpush.bf16.msra.mxu0 %v385
  %492 = vmatpush.bf16.msra.mxu0 %v384
  %493 = vmatpush.bf16.msra.mxu0 %v383
  %494 = vmatpush.bf16.msra.mxu0 %v382
  %495 = vmatpush.bf16.msra.mxu0 %v381
  %496 = vmatpush.bf16.msra.mxu0 %v380
  %497 = vmatpush.bf16.msra.mxu0 %v379
  %498 = vmatpush.bf16.msra.mxu0 %v378
  %499 = vmatmul.bf16.gmra.mxu0 %v243
  %v500 = vpop.f32.mrf.mxu0
  %v501 = vadd.f32 %v412, %v500
  %v502 = vpop.f32.mrf.mxu0
  %v503 = vadd.f32 %v414, %v502
  %504 = vmatmul.bf16.gmra.mxu0 %v245
  %v505 = vpop.f32.mrf.mxu0
  %v506 = vadd.f32 %v417, %v505
  %v507 = vpop.f32.mrf.mxu0
  %v508 = vadd.f32 %v419, %v507
  %509 = vmatmul.bf16.gmra.mxu0 %v247
  %v510 = vpop.f32.mrf.mxu0
  %v511 = vadd.f32 %v422, %v510
  %v512 = vpop.f32.mrf.mxu0
  %v513 = vadd.f32 %v424, %v512
  %514 = vmatmul.bf16.gmra.mxu0 %v249
  %v515 = vpop.f32.mrf.mxu0
  %v516 = vadd.f32 %v427, %v515
  %v517 = vpop.f32.mrf.mxu0
  %v518 = vadd.f32 %v429, %v517
  %519 = vmatmul.bf16.gmra.mxu0 %v251
  %v520 = vpop.f32.mrf.mxu0
  %v521 = vadd.f32 %v432, %v520
  %v522 = vpop.f32.mrf.mxu0
  %v523 = vadd.f32 %v434, %v522
  %524 = vmatmul.bf16.gmra.mxu0 %v253
  %v525 = vpop.f32.mrf.mxu0
  %v526 = vadd.f32 %v437, %v525
  %v527 = vpop.f32.mrf.mxu0
  %v528 = vadd.f32 %v439, %v527
  %529 = vmatmul.bf16.gmra.mxu0 %v255
  %v530 = vpop.f32.mrf.mxu0
  %v531 = vadd.f32 %v442, %v530
  %v532 = vpop.f32.mrf.mxu0
  %v533 = vadd.f32 %v444, %v532
  %534 = vmatmul.bf16.gmra.mxu0 %v257
  %v535 = vpop.f32.mrf.mxu0
  %v536 = vadd.f32 %v447, %v535
  %v537 = vpop.f32.mrf.mxu0
  %v538 = vadd.f32 %v449, %v537
  %539 = vmatmul.bf16.gmra.mxu0 %v259
  %v540 = vpop.f32.mrf.mxu0
  %v541 = vadd.f32 %v452, %v540
  %v542 = vpop.f32.mrf.mxu0
  %v543 = vadd.f32 %v454, %v542
  %544 = vmatmul.bf16.gmra.mxu0 %v261
  %v545 = vpop.f32.mrf.mxu0
  %v546 = vadd.f32 %v457, %v545
  %v547 = vpop.f32.mrf.mxu0
  %v548 = vadd.f32 %v459, %v547
  %549 = vmatmul.bf16.gmra.mxu0 %v263
  %v550 = vpop.f32.mrf.mxu0
  %v551 = vadd.f32 %v462, %v550
  %v552 = vpop.f32.mrf.mxu0
  %v553 = vadd.f32 %v464, %v552
  %554 = vmatmul.bf16.gmra.mxu0 %v265
  %v555 = vpop.f32.mrf.mxu0
  %v556 = vadd.f32 %v467, %v555
  %v557 = vpop.f32.mrf.mxu0
  %v558 = vadd.f32 %v469, %v557
  %559 = vmatmul.bf16.gmra.mxu0 %v267
  %v560 = vpop.f32.mrf.mxu0
  %v561 = vadd.f32 %v472, %v560
  %v562 = vpop.f32.mrf.mxu0
  %v563 = vadd.f32 %v474, %v562
  %564 = vmatmul.bf16.gmra.mxu0 %v269
  %v565 = vpop.f32.mrf.mxu0
  %v566 = vadd.f32 %v477, %v565
  %v567 = vpop.f32.mrf.mxu0
  %v568 = vadd.f32 %v479, %v567
  %569 = vmatmul.bf16.gmra.mxu0 %v271
  %v570 = vpop.f32.mrf.mxu0
  %v571 = vadd.f32 %v482, %v570
  %v572 = vpop.f32.mrf.mxu0
  %v573 = vadd.f32 %v484, %v572
  %574 = vmatmul.bf16.gmra.mxu0 %v273
  %v575 = vpop.f32.mrf.mxu0
  %v576 = vadd.f32 %v487, %v575
  %v577 = vpop.f32.mrf.mxu0
  %v578 = vadd.f32 %v489, %v577
  %579 = vdwg.mxu0
  %v580 = vadd.f32 %v50, %v501
  %v581 = vadd.f32 %v51, %v503
  %v582 = vadd.f32 %v52, %v506
  %v583 = vadd.f32 %v53, %v508
  %v584 = vadd.f32 %v54, %v511
  %v585 = vadd.f32 %v55, %v513
  %v586 = vadd.f32 %v56, %v516
  %v587 = vadd.f32 %v57, %v518
  %v588 = vadd.f32 %v58, %v521
  %v589 = vadd.f32 %v59, %v523
  %v590 = vadd.f32 %v60, %v526
  %v591 = vadd.f32 %v61, %v528
  %v592 = vadd.f32 %v62, %v531
  %v593 = vadd.f32 %v63, %v533
  %v594 = vadd.f32 %v64, %v536
  %v595 = vadd.f32 %v65, %v538
  %v596 = vadd.f32 %v66, %v541
  %v597 = vadd.f32 %v67, %v543
  %v598 = vadd.f32 %v68, %v546
  %v599 = vadd.f32 %v69, %v548
  %v600 = vadd.f32 %v70, %v551
  %v601 = vadd.f32 %v71, %v553
  %v602 = vadd.f32 %v72, %v556
  %v603 = vadd.f32 %v73, %v558
  %v604 = vadd.f32 %v74, %v561
  %v605 = vadd.f32 %v75, %v563
  %v606 = vadd.f32 %v76, %v566
  %v607 = vadd.f32 %v77, %v568
  %v608 = vadd.f32 %v78, %v571
  %v609 = vadd.f32 %v79, %v573
  %v610 = vadd.f32 %v80, %v576
  %v611 = vadd.f32 %v81, %v578
  %612 = vst [vmem:[#allocation2] sm:$0xff] %v580
  %613 = vst [vmem:[#allocation2 + $0x8] sm:$0xff] %v581
  %614 = vst [vmem:[#allocation2 + $0x10] sm:$0xff] %v582
  %615 = vst [vmem:[#allocation2 + $0x18] sm:$0xff] %v583
  %616 = vst [vmem:[#allocation2 + $0x20] sm:$0xff] %v584
  %617 = vst [vmem:[#allocation2 + $0x28] sm:$0xff] %v585
  %618 = vst [vmem:[#allocation2 + $0x30] sm:$0xff] %v586
  %619 = vst [vmem:[#allocation2 + $0x38] sm:$0xff] %v587
  %620 = vst [vmem:[#allocation2 + $0x40] sm:$0xff] %v588
  %621 = vst [vmem:[#allocation2 + $0x48] sm:$0xff] %v589
  %622 = vst [vmem:[#allocation2 + $0x50] sm:$0xff] %v590
  %623 = vst [vmem:[#allocation2 + $0x58] sm:$0xff] %v591
  %624 = vst [vmem:[#allocation2 + $0x60] sm:$0xff] %v592
  %625 = vst [vmem:[#allocation2 + $0x68] sm:$0xff] %v593
  %626 = vst [vmem:[#allocation2 + $0x70] sm:$0xff] %v594
  %627 = vst [vmem:[#allocation2 + $0x78] sm:$0xff] %v595
  %628 = vst [vmem:[#allocation2 + $0x80] sm:$0xff] %v596
  %629 = vst [vmem:[#allocation2 + $0x88] sm:$0xff] %v597
  %630 = vst [vmem:[#allocation2 + $0x90] sm:$0xff] %v598
  %631 = vst [vmem:[#allocation2 + $0x98] sm:$0xff] %v599
  %632 = vst [vmem:[#allocation2 + $0xa0] sm:$0xff] %v600
  %633 = vst [vmem:[#allocation2 + $0xa8] sm:$0xff] %v601
  %634 = vst [vmem:[#allocation2 + $0xb0] sm:$0xff] %v602
  %635 = vst [vmem:[#allocation2 + $0xb8] sm:$0xff] %v603
  %636 = vst [vmem:[#allocation2 + $0xc0] sm:$0xff] %v604
  %637 = vst [vmem:[#allocation2 + $0xc8] sm:$0xff] %v605
  %638 = vst [vmem:[#allocation2 + $0xd0] sm:$0xff] %v606
  %639 = vst [vmem:[#allocation2 + $0xd8] sm:$0xff] %v607
  %640 = vst [vmem:[#allocation2 + $0xe0] sm:$0xff] %v608
  %641 = vst [vmem:[#allocation2 + $0xe8] sm:$0xff] %v609
  %642 = vst [vmem:[#allocation2 + $0xf0] sm:$0xff] %v610
  %643 = vst [vmem:[#allocation2 + $0xf8] sm:$0xff] %v611
  // Predicated region
  $region18: #{_lambda_.3} parent=0 // pred_check
    %p644 = pneg %p14
  $region19: #{_lambda_.3} parent=0 // pred_check_branch
    %646 = sbr.rel (%p644) target = $region21
  $region20: #{_lambda_.3} parent=0 // pred_region
    %v647 = vld [vmem:[#allocation2] sm:$0xff]
    %v648 = vld [vmem:[#allocation2 + $0x8] sm:$0xff]
    %v649 = vld [vmem:[#allocation2 + $0x10] sm:$0xff]
    %v650 = vld [vmem:[#allocation2 + $0x18] sm:$0xff]
    %v651 = vld [vmem:[#allocation2 + $0x20] sm:$0xff]
    %v652 = vld [vmem:[#allocation2 + $0x28] sm:$0xff]
    %v653 = vld [vmem:[#allocation2 + $0x30] sm:$0xff]
    %v654 = vld [vmem:[#allocation2 + $0x38] sm:$0xff]
    %v655 = vld [vmem:[#allocation2 + $0x40] sm:$0xff]
    %v656 = vld [vmem:[#allocation2 + $0x48] sm:$0xff]
    %v657 = vld [vmem:[#allocation2 + $0x50] sm:$0xff]
    %v658 = vld [vmem:[#allocation2 + $0x58] sm:$0xff]
    %v659 = vld [vmem:[#allocation2 + $0x60] sm:$0xff]
    %v660 = vld [vmem:[#allocation2 + $0x68] sm:$0xff]
    %v661 = vld [vmem:[#allocation2 + $0x70] sm:$0xff]
    %v662 = vld [vmem:[#allocation2 + $0x78] sm:$0xff]
    %v663 = vld [vmem:[#allocation2 + $0x80] sm:$0xff]
    %v664 = vld [vmem:[#allocation2 + $0x88] sm:$0xff]
    %v665 = vld [vmem:[#allocation2 + $0x90] sm:$0xff]
    %v666 = vld [vmem:[#allocation2 + $0x98] sm:$0xff]
    %v667 = vld [vmem:[#allocation2 + $0xa0] sm:$0xff]
    %v668 = vld [vmem:[#allocation2 + $0xa8] sm:$0xff]
    %v669 = vld [vmem:[#allocation2 + $0xb0] sm:$0xff]
    %v670 = vld [vmem:[#allocation2 + $0xb8] sm:$0xff]
    %v671 = vld [vmem:[#allocation2 + $0xc0] sm:$0xff]
    %v672 = vld [vmem:[#allocation2 + $0xc8] sm:$0xff]
    %v673 = vld [vmem:[#allocation2 + $0xd0] sm:$0xff]
    %v674 = vld [vmem:[#allocation2 + $0xd8] sm:$0xff]
    %v675 = vld [vmem:[#allocation2 + $0xe0] sm:$0xff]
    %v676 = vld [vmem:[#allocation2 + $0xe8] sm:$0xff]
    %v677 = vld [vmem:[#allocation2 + $0xf0] sm:$0xff]
    %v678 = vld [vmem:[#allocation2 + $0xf8] sm:$0xff]
    %v679 = vld [vmem:[%s2] sm:$0x1]
    %v681 = vperm.slane %v679, 0
    %v683 = vadd.f32 %v647, %v681
    %v684 = vadd.f32 %v648, %v681
    %v685 = vadd.f32 %v649, %v681
    %v686 = vadd.f32 %v650, %v681
    %v687 = vadd.f32 %v651, %v681
    %v688 = vadd.f32 %v652, %v681
    %v689 = vadd.f32 %v653, %v681
    %v690 = vadd.f32 %v654, %v681
    %v691 = vadd.f32 %v655, %v681
    %v692 = vadd.f32 %v656, %v681
    %v693 = vadd.f32 %v657, %v681
    %v694 = vadd.f32 %v658, %v681
    %v695 = vadd.f32 %v659, %v681
    %v696 = vadd.f32 %v660, %v681
    %v697 = vadd.f32 %v661, %v681
    %v698 = vadd.f32 %v662, %v681
    %v699 = vadd.f32 %v663, %v681
    %v700 = vadd.f32 %v664, %v681
    %v701 = vadd.f32 %v665, %v681
    %v702 = vadd.f32 %v666, %v681
    %v703 = vadd.f32 %v667, %v681
    %v704 = vadd.f32 %v668, %v681
    %v705 = vadd.f32 %v669, %v681
    %v706 = vadd.f32 %v670, %v681
    %v707 = vadd.f32 %v671, %v681
    %v708 = vadd.f32 %v672, %v681
    %v709 = vadd.f32 %v673, %v681
    %v710 = vadd.f32 %v674, %v681
    %v711 = vadd.f32 %v675, %v681
    %v712 = vadd.f32 %v676, %v681
    %v713 = vadd.f32 %v677, %v681
    %v714 = vadd.f32 %v678, %v681
    %715 = vmax.xlane.f32.xlu0 %v683
    %v716 = vpop.xlane.xlu0 %715
    %717 = vmax.xlane.f32.xlu0 %v684
    %v718 = vpop.xlane.xlu0 %717
    %719 = vmax.xlane.f32.xlu0 %v685
    %v720 = vpop.xlane.xlu0 %719
    %721 = vmax.xlane.f32.xlu0 %v686
    %v722 = vpop.xlane.xlu0 %721
    %723 = vmax.xlane.f32.xlu0 %v687
    %v724 = vpop.xlane.xlu0 %723
    %725 = vmax.xlane.f32.xlu0 %v688
    %v726 = vpop.xlane.xlu0 %725
    %727 = vmax.xlane.f32.xlu0 %v689
    %v728 = vpop.xlane.xlu0 %727
    %729 = vmax.xlane.f32.xlu0 %v690
    %v730 = vpop.xlane.xlu0 %729
    %731 = vmax.xlane.f32.xlu0 %v691
    %v732 = vpop.xlane.xlu0 %731
    %733 = vmax.xlane.f32.xlu0 %v692
    %v734 = vpop.xlane.xlu0 %733
    %735 = vmax.xlane.f32.xlu0 %v693
    %v736 = vpop.xlane.xlu0 %735
    %737 = vmax.xlane.f32.xlu0 %v694
    %v738 = vpop.xlane.xlu0 %737
    %739 = vmax.xlane.f32.xlu0 %v695
    %v740 = vpop.xlane.xlu0 %739
    %741 = vmax.xlane.f32.xlu0 %v696
    %v742 = vpop.xlane.xlu0 %741
    %743 = vmax.xlane.f32.xlu0 %v697
    %v744 = vpop.xlane.xlu0 %743
    %745 = vmax.xlane.f32.xlu0 %v698
    %v746 = vpop.xlane.xlu0 %745
    %747 = vmax.xlane.f32.xlu0 %v699
    %v748 = vpop.xlane.xlu0 %747
    %749 = vmax.xlane.f32.xlu0 %v700
    %v750 = vpop.xlane.xlu0 %749
    %751 = vmax.xlane.f32.xlu0 %v701
    %v752 = vpop.xlane.xlu0 %751
    %753 = vmax.xlane.f32.xlu0 %v702
    %v754 = vpop.xlane.xlu0 %753
    %755 = vmax.xlane.f32.xlu0 %v703
    %v756 = vpop.xlane.xlu0 %755
    %757 = vmax.xlane.f32.xlu0 %v704
    %v758 = vpop.xlane.xlu0 %757
    %759 = vmax.xlane.f32.xlu0 %v705
    %v760 = vpop.xlane.xlu0 %759
    %761 = vmax.xlane.f32.xlu0 %v706
    %v762 = vpop.xlane.xlu0 %761
    %763 = vmax.xlane.f32.xlu0 %v707
    %v764 = vpop.xlane.xlu0 %763
    %765 = vmax.xlane.f32.xlu0 %v708
    %v766 = vpop.xlane.xlu0 %765
    %767 = vmax.xlane.f32.xlu0 %v709
    %v768 = vpop.xlane.xlu0 %767
    %769 = vmax.xlane.f32.xlu0 %v710
    %v770 = vpop.xlane.xlu0 %769
    %771 = vmax.xlane.f32.xlu0 %v711
    %v772 = vpop.xlane.xlu0 %771
    %773 = vmax.xlane.f32.xlu0 %v712
    %v774 = vpop.xlane.xlu0 %773
    %775 = vmax.xlane.f32.xlu0 %v713
    %v776 = vpop.xlane.xlu0 %775
    %777 = vmax.xlane.f32.xlu0 %v714
    %v778 = vpop.xlane.xlu0 %777
    %v779 = vsub.f32 %v683, %v716
    %v780 = vsub.f32 %v684, %v718
    %v781 = vsub.f32 %v685, %v720
    %v782 = vsub.f32 %v686, %v722
    %v783 = vsub.f32 %v687, %v724
    %v784 = vsub.f32 %v688, %v726
    %v785 = vsub.f32 %v689, %v728
    %v786 = vsub.f32 %v690, %v730
    %v787 = vsub.f32 %v691, %v732
    %v788 = vsub.f32 %v692, %v734
    %v789 = vsub.f32 %v693, %v736
    %v790 = vsub.f32 %v694, %v738
    %v791 = vsub.f32 %v695, %v740
    %v792 = vsub.f32 %v696, %v742
    %v793 = vsub.f32 %v697, %v744
    %v794 = vsub.f32 %v698, %v746
    %v795 = vsub.f32 %v699, %v748
    %v796 = vsub.f32 %v700, %v750
    %v797 = vsub.f32 %v701, %v752
    %v798 = vsub.f32 %v702, %v754
    %v799 = vsub.f32 %v703, %v756
    %v800 = vsub.f32 %v704, %v758
    %v801 = vsub.f32 %v705, %v760
    %v802 = vsub.f32 %v706, %v762
    %v803 = vsub.f32 %v707, %v764
    %v804 = vsub.f32 %v708, %v766
    %v805 = vsub.f32 %v709, %v768
    %v806 = vsub.f32 %v710, %v770
    %v807 = vsub.f32 %v711, %v772
    %v808 = vsub.f32 %v712, %v774
    %v809 = vsub.f32 %v713, %v776
    %v810 = vsub.f32 %v714, %v778
    %v811 = vmul.f32 %v779, 1.442695
    %v812 = vpow.pop %v811
    %v813 = vmul.f32 %v780, 1.442695
    %v814 = vpow.pop %v813
    %v815 = vmul.f32 %v781, 1.442695
    %v816 = vpow.pop %v815
    %v817 = vmul.f32 %v782, 1.442695
    %v818 = vpow.pop %v817
    %v819 = vmul.f32 %v783, 1.442695
    %v820 = vpow.pop %v819
    %v821 = vmul.f32 %v784, 1.442695
    %v822 = vpow.pop %v821
    %v823 = vmul.f32 %v785, 1.442695
    %v824 = vpow.pop %v823
    %v825 = vmul.f32 %v786, 1.442695
    %v826 = vpow.pop %v825
    %v827 = vmul.f32 %v787, 1.442695
    %v828 = vpow.pop %v827
    %v829 = vmul.f32 %v788, 1.442695
    %v830 = vpow.pop %v829
    %v831 = vmul.f32 %v789, 1.442695
    %v832 = vpow.pop %v831
    %v833 = vmul.f32 %v790, 1.442695
    %v834 = vpow.pop %v833
    %v835 = vmul.f32 %v791, 1.442695
    %v836 = vpow.pop %v835
    %v837 = vmul.f32 %v792, 1.442695
    %v838 = vpow.pop %v837
    %v839 = vmul.f32 %v793, 1.442695
    %v840 = vpow.pop %v839
    %v841 = vmul.f32 %v794, 1.442695
    %v842 = vpow.pop %v841
    %v843 = vmul.f32 %v795, 1.442695
    %v844 = vpow.pop %v843
    %v845 = vmul.f32 %v796, 1.442695
    %v846 = vpow.pop %v845
    %v847 = vmul.f32 %v797, 1.442695
    %v848 = vpow.pop %v847
    %v849 = vmul.f32 %v798, 1.442695
    %v850 = vpow.pop %v849
    %v851 = vmul.f32 %v799, 1.442695
    %v852 = vpow.pop %v851
    %v853 = vmul.f32 %v800, 1.442695
    %v854 = vpow.pop %v853
    %v855 = vmul.f32 %v801, 1.442695
    %v856 = vpow.pop %v855
    %v857 = vmul.f32 %v802, 1.442695
    %v858 = vpow.pop %v857
    %v859 = vmul.f32 %v803, 1.442695
    %v860 = vpow.pop %v859
    %v861 = vmul.f32 %v804, 1.442695
    %v862 = vpow.pop %v861
    %v863 = vmul.f32 %v805, 1.442695
    %v864 = vpow.pop %v863
    %v865 = vmul.f32 %v806, 1.442695
    %v866 = vpow.pop %v865
    %v867 = vmul.f32 %v807, 1.442695
    %v868 = vpow.pop %v867
    %v869 = vmul.f32 %v808, 1.442695
    %v870 = vpow.pop %v869
    %v871 = vmul.f32 %v809, 1.442695
    %v872 = vpow.pop %v871
    %v873 = vmul.f32 %v810, 1.442695
    %v874 = vpow.pop %v873
    %875 = vadd.xlane.f32.xlu0 %v812
    %v876 = vpop.xlane.xlu0 %875
    %877 = vadd.xlane.f32.xlu0 %v814
    %v878 = vpop.xlane.xlu0 %877
    %879 = vadd.xlane.f32.xlu0 %v816
    %v880 = vpop.xlane.xlu0 %879
    %881 = vadd.xlane.f32.xlu0 %v818
    %v882 = vpop.xlane.xlu0 %881
    %883 = vadd.xlane.f32.xlu0 %v820
    %v884 = vpop.xlane.xlu0 %883
    %885 = vadd.xlane.f32.xlu0 %v822
    %v886 = vpop.xlane.xlu0 %885
    %887 = vadd.xlane.f32.xlu0 %v824
    %v888 = vpop.xlane.xlu0 %887
    %889 = vadd.xlane.f32.xlu0 %v826
    %v890 = vpop.xlane.xlu0 %889
    %891 = vadd.xlane.f32.xlu0 %v828
    %v892 = vpop.xlane.xlu0 %891
    %893 = vadd.xlane.f32.xlu0 %v830
    %v894 = vpop.xlane.xlu0 %893
    %895 = vadd.xlane.f32.xlu0 %v832
    %v896 = vpop.xlane.xlu0 %895
    %897 = vadd.xlane.f32.xlu0 %v834
    %v898 = vpop.xlane.xlu0 %897
    %899 = vadd.xlane.f32.xlu0 %v836
    %v900 = vpop.xlane.xlu0 %899
    %901 = vadd.xlane.f32.xlu0 %v838
    %v902 = vpop.xlane.xlu0 %901
    %903 = vadd.xlane.f32.xlu0 %v840
    %v904 = vpop.xlane.xlu0 %903
    %905 = vadd.xlane.f32.xlu0 %v842
    %v906 = vpop.xlane.xlu0 %905
    %907 = vadd.xlane.f32.xlu0 %v844
    %v908 = vpop.xlane.xlu0 %907
    %909 = vadd.xlane.f32.xlu0 %v846
    %v910 = vpop.xlane.xlu0 %909
    %911 = vadd.xlane.f32.xlu0 %v848
    %v912 = vpop.xlane.xlu0 %911
    %913 = vadd.xlane.f32.xlu0 %v850
    %v914 = vpop.xlane.xlu0 %913
    %915 = vadd.xlane.f32.xlu0 %v852
    %v916 = vpop.xlane.xlu0 %915
    %917 = vadd.xlane.f32.xlu0 %v854
    %v918 = vpop.xlane.xlu0 %917
    %919 = vadd.xlane.f32.xlu0 %v856
    %v920 = vpop.xlane.xlu0 %919
    %921 = vadd.xlane.f32.xlu0 %v858
    %v922 = vpop.xlane.xlu0 %921
    %923 = vadd.xlane.f32.xlu0 %v860
    %v924 = vpop.xlane.xlu0 %923
    %925 = vadd.xlane.f32.xlu0 %v862
    %v926 = vpop.xlane.xlu0 %925
    %927 = vadd.xlane.f32.xlu0 %v864
    %v928 = vpop.xlane.xlu0 %927
    %929 = vadd.xlane.f32.xlu0 %v866
    %v930 = vpop.xlane.xlu0 %929
    %931 = vadd.xlane.f32.xlu0 %v868
    %v932 = vpop.xlane.xlu0 %931
    %933 = vadd.xlane.f32.xlu0 %v870
    %v934 = vpop.xlane.xlu0 %933
    %935 = vadd.xlane.f32.xlu0 %v872
    %v936 = vpop.xlane.xlu0 %935
    %937 = vadd.xlane.f32.xlu0 %v874
    %v938 = vpop.xlane.xlu0 %937
    %v939 = vlog2.pop %v876
    %v940 = vmul.f32 %v939, 0.6931472
    %v941 = vlog2.pop %v878
    %v942 = vmul.f32 %v941, 0.6931472
    %v943 = vlog2.pop %v880
    %v944 = vmul.f32 %v943, 0.6931472
    %v945 = vlog2.pop %v882
    %v946 = vmul.f32 %v945, 0.6931472
    %v947 = vlog2.pop %v884
    %v948 = vmul.f32 %v947, 0.6931472
    %v949 = vlog2.pop %v886
    %v950 = vmul.f32 %v949, 0.6931472
    %v951 = vlog2.pop %v888
    %v952 = vmul.f32 %v951, 0.6931472
    %v953 = vlog2.pop %v890
    %v954 = vmul.f32 %v953, 0.6931472
    %v955 = vlog2.pop %v892
    %v956 = vmul.f32 %v955, 0.6931472
    %v957 = vlog2.pop %v894
    %v958 = vmul.f32 %v957, 0.6931472
    %v959 = vlog2.pop %v896
    %v960 = vmul.f32 %v959, 0.6931472
    %v961 = vlog2.pop %v898
    %v962 = vmul.f32 %v961, 0.6931472
    %v963 = vlog2.pop %v900
    %v964 = vmul.f32 %v963, 0.6931472
    %v965 = vlog2.pop %v902
    %v966 = vmul.f32 %v965, 0.6931472
    %v967 = vlog2.pop %v904
    %v968 = vmul.f32 %v967, 0.6931472
    %v969 = vlog2.pop %v906
    %v970 = vmul.f32 %v969, 0.6931472
    %v971 = vlog2.pop %v908
    %v972 = vmul.f32 %v971, 0.6931472
    %v973 = vlog2.pop %v910
    %v974 = vmul.f32 %v973, 0.6931472
    %v975 = vlog2.pop %v912
    %v976 = vmul.f32 %v975, 0.6931472
    %v977 = vlog2.pop %v914
    %v978 = vmul.f32 %v977, 0.6931472
    %v979 = vlog2.pop %v916
    %v980 = vmul.f32 %v979, 0.6931472
    %v981 = vlog2.pop %v918
    %v982 = vmul.f32 %v981, 0.6931472
    %v983 = vlog2.pop %v920
    %v984 = vmul.f32 %v983, 0.6931472
    %v985 = vlog2.pop %v922
    %v986 = vmul.f32 %v985, 0.6931472
    %v987 = vlog2.pop %v924
    %v988 = vmul.f32 %v987, 0.6931472
    %v989 = vlog2.pop %v926
    %v990 = vmul.f32 %v989, 0.6931472
    %v991 = vlog2.pop %v928
    %v992 = vmul.f32 %v991, 0.6931472
    %v993 = vlog2.pop %v930
    %v994 = vmul.f32 %v993, 0.6931472
    %v995 = vlog2.pop %v932
    %v996 = vmul.f32 %v995, 0.6931472
    %v997 = vlog2.pop %v934
    %v998 = vmul.f32 %v997, 0.6931472
    %v999 = vlog2.pop %v936
    %v1000 = vmul.f32 %v999, 0.6931472
    %v1001 = vlog2.pop %v938
    %v1002 = vmul.f32 %v1001, 0.6931472
    %v1003 = vsub.f32 %v779, %v940
    %v1004 = vsub.f32 %v780, %v942
    %v1005 = vsub.f32 %v781, %v944
    %v1006 = vsub.f32 %v782, %v946
    %v1007 = vsub.f32 %v783, %v948
    %v1008 = vsub.f32 %v784, %v950
    %v1009 = vsub.f32 %v785, %v952
    %v1010 = vsub.f32 %v786, %v954
    %v1011 = vsub.f32 %v787, %v956
    %v1012 = vsub.f32 %v788, %v958
    %v1013 = vsub.f32 %v789, %v960
    %v1014 = vsub.f32 %v790, %v962
    %v1015 = vsub.f32 %v791, %v964
    %v1016 = vsub.f32 %v792, %v966
    %v1017 = vsub.f32 %v793, %v968
    %v1018 = vsub.f32 %v794, %v970
    %v1019 = vsub.f32 %v795, %v972
    %v1020 = vsub.f32 %v796, %v974
    %v1021 = vsub.f32 %v797, %v976
    %v1022 = vsub.f32 %v798, %v978
    %v1023 = vsub.f32 %v799, %v980
    %v1024 = vsub.f32 %v800, %v982
    %v1025 = vsub.f32 %v801, %v984
    %v1026 = vsub.f32 %v802, %v986
    %v1027 = vsub.f32 %v803, %v988
    %v1028 = vsub.f32 %v804, %v990
    %v1029 = vsub.f32 %v805, %v992
    %v1030 = vsub.f32 %v806, %v994
    %v1031 = vsub.f32 %v807, %v996
    %v1032 = vsub.f32 %v808, %v998
    %v1033 = vsub.f32 %v809, %v1000
    %v1034 = vsub.f32 %v810, %v1002
    %1035 = vst [vmem:[%s3] sm:$0xff] %v1003
    %1036 = vst [vmem:[%s3 + $0x8] sm:$0xff] %v1004
    %1037 = vst [vmem:[%s3 + $0x10] sm:$0xff] %v1005
    %1038 = vst [vmem:[%s3 + $0x18] sm:$0xff] %v1006
    %1039 = vst [vmem:[%s3 + $0x20] sm:$0xff] %v1007
    %1040 = vst [vmem:[%s3 + $0x28] sm:$0xff] %v1008
    %1041 = vst [vmem:[%s3 + $0x30] sm:$0xff] %v1009
    %1042 = vst [vmem:[%s3 + $0x38] sm:$0xff] %v1010
    %1043 = vst [vmem:[%s3 + $0x40] sm:$0xff] %v1011
    %1044 = vst [vmem:[%s3 + $0x48] sm:$0xff] %v1012
    %1045 = vst [vmem:[%s3 + $0x50] sm:$0xff] %v1013
    %1046 = vst [vmem:[%s3 + $0x58] sm:$0xff] %v1014
    %1047 = vst [vmem:[%s3 + $0x60] sm:$0xff] %v1015
    %1048 = vst [vmem:[%s3 + $0x68] sm:$0xff] %v1016
    %1049 = vst [vmem:[%s3 + $0x70] sm:$0xff] %v1017
    %1050 = vst [vmem:[%s3 + $0x78] sm:$0xff] %v1018
    %1051 = vst [vmem:[%s3 + $0x80] sm:$0xff] %v1019
    %1052 = vst [vmem:[%s3 + $0x88] sm:$0xff] %v1020
    %1053 = vst [vmem:[%s3 + $0x90] sm:$0xff] %v1021
    %1054 = vst [vmem:[%s3 + $0x98] sm:$0xff] %v1022
    %1055 = vst [vmem:[%s3 + $0xa0] sm:$0xff] %v1023
    %1056 = vst [vmem:[%s3 + $0xa8] sm:$0xff] %v1024
    %1057 = vst [vmem:[%s3 + $0xb0] sm:$0xff] %v1025
    %1058 = vst [vmem:[%s3 + $0xb8] sm:$0xff] %v1026
    %1059 = vst [vmem:[%s3 + $0xc0] sm:$0xff] %v1027
    %1060 = vst [vmem:[%s3 + $0xc8] sm:$0xff] %v1028
    %1061 = vst [vmem:[%s3 + $0xd0] sm:$0xff] %v1029
    %1062 = vst [vmem:[%s3 + $0xd8] sm:$0xff] %v1030
    %1063 = vst [vmem:[%s3 + $0xe0] sm:$0xff] %v1031
    %1064 = vst [vmem:[%s3 + $0xe8] sm:$0xff] %v1032
    %1065 = vst [vmem:[%s3 + $0xf0] sm:$0xff] %v1033
    %1066 = vst [vmem:[%s3 + $0xf8] sm:$0xff] %v1034
  $region21: #{_lambda_.3} parent=0 // pred_fallthru
    _
  // Predicated region
  $region22: #{_lambda_.3} parent=0 // pred_check
    _
  $region23: #{_lambda_.3} parent=0 // pred_check_branch
    %1068 = sbr.rel (0) target = $region25
  $region24: #{_lambda_.3} parent=0 // pred_region
    _
  $region25: #{_lambda_.3} parent=0 // pred_fallthru
    _
  // Predicated region
  $region26: #{_lambda_.3} parent=0 // pred_check
    _
  $region27: #{_lambda_.3} parent=0 // pred_check_branch
    %1070 = sbr.rel (0) target = $region29
  $region28: #{_lambda_.3} parent=0 // pred_region
    _
  $region29: #{_lambda_.3} parent=0 // pred_fallthru
    _

</llo_original>
